<compile_context>
chip_gen: v6e
topology: v6e:2x2x1
jax: 0.10.0
libtpu: 0.0.40
codegen_flags: <defaults>
</compile_context>

<pallas_src>
import math
import jax
import jax.numpy as jnp
from jax.experimental import pallas as pl
from jax.experimental.pallas import tpu as pltpu


# --------------------------------------------------------------------------- #
# Small helpers
# --------------------------------------------------------------------------- #
def _round_up(x, m):
    return ((x + m - 1) // m) * m


def _sublane_pack(dtype):
    """Rows per packed vreg tile: 8 for f32, 16 for bf16/f16, 32 for int8/fp8."""
    itemsize = jnp.dtype(dtype).itemsize
    return max(8, 32 // max(1, itemsize))


def _vmem_capacity_bytes():
    """Generation-aware VMEM size (128 MiB v5e/v6e, 64 MiB v7x). Safe fallback."""
    try:
        info = pltpu.get_tpu_info()
        cap = getattr(info, "vmem_capacity_bytes", None)
        if cap:
            return int(cap)
    except Exception:
        pass
    return 64 << 20  # conservative (v7x-sized) default


def _feature_align():
    """256 for wide dims on 2x256x256-MXU chips (v6e/v7x); 128 otherwise (v5e)."""
    try:
        kind = jax.devices()[0].device_kind.lower()
    except Exception:
        return 128
    if "v6" in kind or "v7" in kind:
        return 256
    return 128


def _pad_dim(d, wide_align):
    # Tiny dims stay 128-aligned (256 there only wastes FLOPs/bytes).
    return _round_up(d, wide_align if d > 128 else 128)


def _divisor_tile(dim, target, step):
    """Largest multiple of `step` that is <= min(target, dim) and divides dim."""
    t = min(target, dim)
    t = max(step, (t // step) * step)
    while dim % t:
        t -= step
    return t


# --------------------------------------------------------------------------- #
# Kernels
# --------------------------------------------------------------------------- #
def ffn_fused_kernel(x_ref, *refs):
    """refs = (w0, b0, w1, b1, ..., out_ref). One M-tile per grid step; all
    weights/biases are VMEM-resident (constant index_map, single-buffered)."""
    out_ref = refs[-1]
    param_refs = refs[:-1]
    n_layers = len(param_refs) // 2

    h = x_ref[...]                                     # (tm, in_p)
    for i in range(n_layers):
        w = param_refs[2 * i][...]                     # (in_p_i, out_p_i)
        b = param_refs[2 * i + 1][...]                 # (1, out_p_i)
        acc = jnp.dot(h, w, preferred_element_type=jnp.float32)
        acc = acc + b.astype(jnp.float32)
        h = acc.astype(x_ref.dtype)                    # per-layer fp16-like requantize
    out_ref[...] = h.astype(out_ref.dtype)


def linear_kernel(x_ref, w_ref, b_ref, o_ref, acc_ref):
    """K/N-tiled Linear (x @ w + b) with f32 scratch accumulator."""
    @pl.when(pl.program_id(2) == 0)
    def _():
        acc_ref[...] = jnp.zeros_like(acc_ref)

    acc_ref[...] += jnp.dot(x_ref[...], w_ref[...],
                            preferred_element_type=jnp.float32)

    @pl.when(pl.program_id(2) == pl.num_programs(2) - 1)
    def _():
        o_ref[...] = (acc_ref[...] + b_ref[...].astype(jnp.float32)).astype(o_ref.dtype)


# --------------------------------------------------------------------------- #
# Parameter preparation (one-time)
# --------------------------------------------------------------------------- #
def prepare_ffn_params(weights, biases, feature_align=None):
    """Zero-pad feature dims so every MXU operand / store is lane-dense.
    Weights are stored pre-transposed as (in, out). Done once, not per call."""
    if feature_align is None:
        feature_align = _feature_align()
    weights_p, biases_p = [], []
    for w, b in zip(weights, biases):
        in_p = _pad_dim(w.shape[0], feature_align)
        out_p = _pad_dim(w.shape[1], feature_align)
        wp = jnp.pad(w, ((0, in_p - w.shape[0]), (0, out_p - w.shape[1])))
        bp = jnp.pad(b, ((0, 0), (0, out_p - b.shape[1])))
        weights_p.append(wp)
        biases_p.append(bp)
    return weights_p, biases_p


# --------------------------------------------------------------------------- #
# Fused (weights VMEM-resident) path
# --------------------------------------------------------------------------- #
def _ffn_fused(x, weights_p, biases_p, out_dim, *, vmem_cap, tm):
    batch, seq, in_dim = x.shape
    M = batch * seq
    dtype = x.dtype
    bpe = jnp.dtype(dtype).itemsize
    pack = _sublane_pack(dtype)

    in_p = weights_p[0].shape[0]
    out_p = weights_p[-1].shape[1]
    max_feat = max(max(w.shape) for w in weights_p)

    flat_params = []
    for w, b in zip(weights_p, biases_p):
        flat_params += [w, b]
    param_bytes = sum(p.size * p.dtype.itemsize for p in flat_params)

    def vmem_need(t, param_bufs):
        return (param_bufs * param_bytes
                + 2 * t * (in_p + out_p) * bpe       # double-buffered x / out tiles
                + 2 * t * max_feat * 4)              # f32 accumulator + staging

    budget = int(0.80 * vmem_cap)

    # M-tile selection: rounded to sublane pack, shrunk to fit the VMEM budget.
    tm_eff = max(pack, min(tm, _round_up(M, pack)))
    tm_eff = (tm_eff // pack) * pack
    while tm_eff > pack and vmem_need(tm_eff, 2) > budget:
        tm_eff = max(pack, ((tm_eff // 2) // pack) * pack)
    # Ensure >= 2 grid steps so ("parallel",) can shard M over v7x's 2 TCs.
    while (M + tm_eff - 1) // tm_eff < 2 and tm_eff // 2 >= pack:
        tm_eff = ((tm_eff // 2) // pack) * pack
    tm_eff = max(pack, tm_eff)

    M_pad = _round_up(M, tm_eff)
    x2d = jnp.pad(x.reshape(M, in_dim), ((0, M_pad - M), (0, in_p - in_dim)))

    flops = 2 * M_pad * sum(w.shape[0] * w.shape[1] for w in weights_p)
    bytes_accessed = (x2d.size + sum(p.size for p in flat_params) + M_pad * out_p) * bpe
    cost = pl.CostEstimate(flops=flops, transcendentals=0,
                           bytes_accessed=bytes_accessed)

    def run(resident_bufs):
        in_specs = [pl.BlockSpec((tm_eff, in_p), lambda i: (i, 0))]
        for w, b in zip(weights_p, biases_p):
            kwargs = {}
            if resident_bufs is not None:
                # Grid-invariant params: don't double-buffer them.
                kwargs = dict(pipeline_mode=pl.Buffered(buffer_count=resident_bufs))
            in_specs.append(pl.BlockSpec(w.shape, lambda i: (0, 0), **kwargs))
            in_specs.append(pl.BlockSpec(b.shape, lambda i: (0, 0), **kwargs))

        need = vmem_need(tm_eff, 1 if resident_bufs == 1 else 2)
        vmem_limit = int(min(max(int(1.5 * need), 8 << 20), int(0.85 * vmem_cap)))

        out2d = pl.pallas_call(
            ffn_fused_kernel,
            out_shape=jax.ShapeDtypeStruct((M_pad, out_p), dtype),
            grid=(M_pad // tm_eff,),
            in_specs=in_specs,
            out_specs=pl.BlockSpec((tm_eff, out_p), lambda i: (i, 0)),
            compiler_params=pltpu.CompilerParams(
                dimension_semantics=("parallel",),
                vmem_limit_bytes=vmem_limit),
            cost_estimate=cost,
        )(x2d, *flat_params)
        return jax.block_until_ready(out2d)

    try:
        out2d = run(1)       # single-buffer the resident weights/biases
    except Exception:
        out2d = run(None)    # fallback: default buffering (always supported)

    return out2d[:M, :out_dim].reshape(batch, seq, out_dim)


# --------------------------------------------------------------------------- #
# Layered (K/N-tiled) fallback path for large hidden dims
# --------------------------------------------------------------------------- #
def _linear_pallas(h, w, b, *, vmem_cap, tm_target):
    M_pad, in_p = h.shape
    out_p = w.shape[1]
    dtype = h.dtype
    bpe = jnp.dtype(dtype).itemsize
    pack = _sublane_pack(dtype)

    tm = _divisor_tile(M_pad, tm_target, pack)
    tn = _divisor_tile(out_p, 256, 128)
    tk = _divisor_tile(in_p, 512, 128)

    def need(tm_, tn_, tk_):
        return (2 * tm_ * tk_ * bpe + 2 * tk_ * tn_ * bpe + 2 * tn_ * bpe
                + 2 * tm_ * tn_ * bpe + tm_ * tn_ * 4)

    budget = int(0.80 * vmem_cap)
    while need(tm, tn, tk) > budget:
        if tk > 128:
            tk = _divisor_tile(in_p, tk // 2, 128)
        elif tm > pack:
            tm = _divisor_tile(M_pad, tm // 2, pack)
        elif tn > 128:
            tn = _divisor_tile(out_p, tn // 2, 128)
        else:
            break

    vmem_limit = int(min(max(int(1.5 * need(tm, tn, tk)), 8 << 20),
                         int(0.85 * vmem_cap)))
    cost = pl.CostEstimate(
        flops=2 * M_pad * in_p * out_p, transcendentals=0,
        bytes_accessed=(h.size + w.size + b.size + M_pad * out_p) * bpe)

    return pl.pallas_call(
        linear_kernel,
        out_shape=jax.ShapeDtypeStruct((M_pad, out_p), dtype),
        grid=(M_pad // tm, out_p // tn, in_p // tk),
        in_specs=[pl.BlockSpec((tm, tk), lambda i, j, k: (i, k)),
                  pl.BlockSpec((tk, tn), lambda i, j, k: (k, j)),
                  pl.BlockSpec((1, tn), lambda i, j, k: (0, j))],
        out_specs=pl.BlockSpec((tm, tn), lambda i, j, k: (i, j)),
        scratch_shapes=[pltpu.VMEM((tm, tn), jnp.float32)],
        compiler_params=pltpu.CompilerParams(
            dimension_semantics=("parallel", "parallel", "arbitrary"),
            vmem_limit_bytes=vmem_limit),
        cost_estimate=cost,
    )(h, w, b)


def _ffn_layered(x, weights_p, biases_p, out_dim, *, vmem_cap, tm):
    batch, seq, in_dim = x.shape
    M = batch * seq
    dtype = x.dtype
    pack = _sublane_pack(dtype)
    in_p = weights_p[0].shape[0]

    M_pad = _round_up(M, pack)
    tm_target = min(tm, M_pad)
    if M_pad >= 2 * pack:                      # keep >= 2 M-steps when possible
        tm_target = min(tm_target, _round_up(M_pad // 2, pack))

    h = jnp.pad(x.reshape(M, in_dim), ((0, M_pad - M), (0, in_p - in_dim)))
    for w, b in zip(weights_p, biases_p):
        h = _linear_pallas(h, w, b, vmem_cap=vmem_cap, tm_target=tm_target)
    return h[:M, :out_dim].reshape(batch, seq, out_dim)


# --------------------------------------------------------------------------- #
# Public forward
# --------------------------------------------------------------------------- #
def ffn_forward(x, weights_p, biases_p, out_dim, *, tm=512, force_path=None):
    """x: (batch, seq, input_dim). weights_p[i]: (in_p, out_p) lane-padded,
    biases_p[i]: (1, out_p) lane-padded. out_dim: true (unpadded) output dim."""
    batch, seq, in_dim = x.shape
    M = batch * seq
    dtype = x.dtype
    vmem_cap = _vmem_capacity_bytes()
    param_bytes = (sum(p.size * p.dtype.itemsize for p in weights_p)
                   + sum(p.size * p.dtype.itemsize for p in biases_p))

    path = force_path
    if path is None:
        if M < 256:
            path = "xla"            # tiny slab: 1-step grid + call overhead lose to XLA
        elif param_bytes > int(0.30 * vmem_cap):
            path = "layered"        # weight stack can't stay VMEM-resident (v7x first)
        else:
            path = "fused"

    if path == "xla":
        in_p = weights_p[0].shape[0]
        h = jnp.pad(x.reshape(M, in_dim), ((0, 0), (0, in_p - in_dim)))
        for w, b in zip(weights_p, biases_p):
            h = (jnp.dot(h, w, preferred_element_type=jnp.float32)
                 + b.astype(jnp.float32)).astype(dtype)
        return h[:, :out_dim].reshape(batch, seq, out_dim)

    if path == "layered":
        return _ffn_layered(x, weights_p, biases_p, out_dim,
                            vmem_cap=vmem_cap, tm=tm)

    return _ffn_fused(x, weights_p, biases_p, out_dim, vmem_cap=vmem_cap, tm=tm)


# --------------------------------------------------------------------------- #
# Parameter init (mirrors nn.Linear defaults); weights stored as (in, out)
# --------------------------------------------------------------------------- #
def init_ffn_params(key, input_dim, hidden_dim, output_dim, num_layers, dtype):
    layer_dim = [hidden_dim] * num_layers
    layer_dim[0] = input_dim
    layer_dim[-1] = output_dim

    weights, biases = [], []
    for i in range(num_layers - 1):
        fan_in, fan_out = layer_dim[i], layer_dim[i + 1]
        key, kw, kb = jax.random.split(key, 3)
        bound = 1.0 / math.sqrt(fan_in)
        w = jax.random.uniform(kw, (fan_in, fan_out), jnp.float32, -bound, bound)
        b = jax.random.uniform(kb, (1, fan_out), jnp.float32, -bound, bound)
        weights.append(w.astype(dtype))
        biases.append(b.astype(dtype))
    return weights, biases


# --------------------------------------------------------------------------- #
# Demo / self-check
# --------------------------------------------------------------------------- #
if __name__ == "__main__":
    key = jax.random.PRNGKey(0)
    dtype = jnp.bfloat16   # TPU analogue of torch.half

    # Small, but M = batch*seq = 512 rows so the fused Pallas path runs with a
    # >=2-step grid (exercising the real kernel, not the tiny-slab shortcut).
    batch, seq = 4, 128
    input_dim, hidden_dim, output_dim, num_layers = 64, 128, 32, 4

    key, kx = jax.random.split(key)
    x = jax.random.normal(kx, (batch, seq, input_dim), jnp.float32).astype(dtype)

    weights, biases = init_ffn_params(key, input_dim, hidden_dim, output_dim,
                                      num_layers, dtype)
    weights_p, biases_p = prepare_ffn_params(weights, biases)   # one-time padding

    def reference(xin):
        m = xin.shape[0] * xin.shape[1]
        h = xin.reshape(m, input_dim)
        for w, b in zip(weights, biases):
            h = (jnp.dot(h, w, preferred_element_type=jnp.float32)
                 + b.astype(jnp.float32)).astype(dtype)
        return h.reshape(xin.shape[0], xin.shape[1], output_dim).astype(jnp.float32)

    ref = reference(x)

    # 1) Fused single-kernel path (weights VMEM-resident, single-buffered).
    y_fused = ffn_forward(x, weights_p, biases_p, output_dim)
    jax.block_until_ready(y_fused)
    assert y_fused.shape == (batch, seq, output_dim)
    assert jnp.allclose(y_fused.astype(jnp.float32), ref, atol=1e-2, rtol=1e-2)

    # 2) Layered K/N-tiled fallback (the path large hidden dims would take).
    y_layered = ffn_forward(x, weights_p, biases_p, output_dim,
                            force_path="layered")
    jax.block_until_ready(y_layered)
    assert jnp.allclose(y_layered.astype(jnp.float32), ref, atol=1e-2, rtol=1e-2)

    # 3) Tiny-slab short-circuit stays numerically identical.
    x_tiny = x[:2, :8]
    y_tiny = ffn_forward(x_tiny, weights_p, biases_p, output_dim)
    jax.block_until_ready(y_tiny)
    assert jnp.allclose(y_tiny.astype(jnp.float32), reference(x_tiny),
                        atol=1e-2, rtol=1e-2)

    print("KERNEL_OK")
</pallas_src>

<mosaic_0001>
module attributes {stable_mosaic.version = 11 : i64} {
  func.func @ffn_fused_kernel(%arg0: i32, %arg1: memref<256x128xbf16, #tpu.memory_space<vmem>>, %arg2: memref<128x128xbf16, #tpu.memory_space<vmem>>, %arg3: memref<1x128xbf16, #tpu.memory_space<vmem>>, %arg4: memref<128x128xbf16, #tpu.memory_space<vmem>>, %arg5: memref<1x128xbf16, #tpu.memory_space<vmem>>, %arg6: memref<128x128xbf16, #tpu.memory_space<vmem>>, %arg7: memref<1x128xbf16, #tpu.memory_space<vmem>>, %arg8: memref<256x128xbf16, #tpu.memory_space<vmem>>) attributes {dimension_semantics = [#tpu.dimension_semantics<parallel>], iteration_bounds = array<i64: 2>, scalar_prefetch = 0 : i64, scratch_operands = 0 : i64, tpu.core_type = #tpu.core_type<tc>, window_params = [{transform_indices = @transform_0, window_bounds = array<i64: 256, 128>}, {pipeline_mode = #tpu.pipeline_mode<synchronous>, transform_indices = @transform_1, window_bounds = array<i64: 128, 128>}, {pipeline_mode = #tpu.pipeline_mode<synchronous>, transform_indices = @transform_2, window_bounds = array<i64: 1, 128>}, {pipeline_mode = #tpu.pipeline_mode<synchronous>, transform_indices = @transform_3, window_bounds = array<i64: 128, 128>}, {pipeline_mode = #tpu.pipeline_mode<synchronous>, transform_indices = @transform_4, window_bounds = array<i64: 1, 128>}, {pipeline_mode = #tpu.pipeline_mode<synchronous>, transform_indices = @transform_5, window_bounds = array<i64: 128, 128>}, {pipeline_mode = #tpu.pipeline_mode<synchronous>, transform_indices = @transform_6, window_bounds = array<i64: 1, 128>}, {transform_indices = @transform_7, window_bounds = array<i64: 256, 128>}]} {
    %c0 = arith.constant 0 : index
    %c0_0 = arith.constant 0 : index
    %0 = vector.load %arg1[%c0, %c0_0] : memref<256x128xbf16, #tpu.memory_space<vmem>>, vector<256x128xbf16>
    %c0_1 = arith.constant 0 : index
    %c0_2 = arith.constant 0 : index
    %1 = vector.load %arg2[%c0_1, %c0_2] : memref<128x128xbf16, #tpu.memory_space<vmem>>, vector<128x128xbf16>
    %c0_3 = arith.constant 0 : index
    %c0_4 = arith.constant 0 : index
    %2 = vector.load %arg3[%c0_3, %c0_4] : memref<1x128xbf16, #tpu.memory_space<vmem>>, vector<1x128xbf16>
    %cst = arith.constant dense<0.000000e+00> : vector<256x128xf32>
    %3 = tpu.matmul %0, %1, %cst {dimension_numbers = #tpu.dot_dimension_numbers<[1], [0], [0], [1], [0, 0, 1, 1], [], []>} : vector<256x128xbf16>, vector<128x128xbf16>, vector<256x128xf32> -> vector<256x128xf32>
    %4 = arith.extf %2 : vector<1x128xbf16> to vector<1x128xf32>
    %5 = vector.broadcast %4 : vector<1x128xf32> to vector<256x128xf32>
    %6 = arith.addf %3, %5 : vector<256x128xf32>
    %7 = arith.truncf %6 : vector<256x128xf32> to vector<256x128xbf16>
    %c0_5 = arith.constant 0 : index
    %c0_6 = arith.constant 0 : index
    %8 = vector.load %arg4[%c0_5, %c0_6] : memref<128x128xbf16, #tpu.memory_space<vmem>>, vector<128x128xbf16>
    %c0_7 = arith.constant 0 : index
    %c0_8 = arith.constant 0 : index
    %9 = vector.load %arg5[%c0_7, %c0_8] : memref<1x128xbf16, #tpu.memory_space<vmem>>, vector<1x128xbf16>
    %cst_9 = arith.constant dense<0.000000e+00> : vector<256x128xf32>
    %10 = tpu.matmul %7, %8, %cst_9 {dimension_numbers = #tpu.dot_dimension_numbers<[1], [0], [0], [1], [0, 0, 1, 1], [], []>} : vector<256x128xbf16>, vector<128x128xbf16>, vector<256x128xf32> -> vector<256x128xf32>
    %11 = arith.extf %9 : vector<1x128xbf16> to vector<1x128xf32>
    %12 = vector.broadcast %11 : vector<1x128xf32> to vector<256x128xf32>
    %13 = arith.addf %10, %12 : vector<256x128xf32>
    %14 = arith.truncf %13 : vector<256x128xf32> to vector<256x128xbf16>
    %c0_10 = arith.constant 0 : index
    %c0_11 = arith.constant 0 : index
    %15 = vector.load %arg6[%c0_10, %c0_11] : memref<128x128xbf16, #tpu.memory_space<vmem>>, vector<128x128xbf16>
    %c0_12 = arith.constant 0 : index
    %c0_13 = arith.constant 0 : index
    %16 = vector.load %arg7[%c0_12, %c0_13] : memref<1x128xbf16, #tpu.memory_space<vmem>>, vector<1x128xbf16>
    %cst_14 = arith.constant dense<0.000000e+00> : vector<256x128xf32>
    %17 = tpu.matmul %14, %15, %cst_14 {dimension_numbers = #tpu.dot_dimension_numbers<[1], [0], [0], [1], [0, 0, 1, 1], [], []>} : vector<256x128xbf16>, vector<128x128xbf16>, vector<256x128xf32> -> vector<256x128xf32>
    %18 = arith.extf %16 : vector<1x128xbf16> to vector<1x128xf32>
    %19 = vector.broadcast %18 : vector<1x128xf32> to vector<256x128xf32>
    %20 = arith.addf %17, %19 : vector<256x128xf32>
    %21 = arith.truncf %20 : vector<256x128xf32> to vector<256x128xbf16>
    %c0_15 = arith.constant 0 : index
    %c0_16 = arith.constant 0 : index
    %22 = vector.load %arg8[%c0_15, %c0_16] : memref<256x128xbf16, #tpu.memory_space<vmem>>, vector<256x128xbf16>
    tpu.vector_store %arg8[%c0_15, %c0_16], %21 {strides = array<i32>} : memref<256x128xbf16, #tpu.memory_space<vmem>>, vector<256x128xbf16>,
    return
  }
  func.func @transform_0(%arg0: i32) -> (i32, i32) {
    %c0_i32 = arith.constant 0 : i32
    %c0_i32_0 = arith.constant 0 : i32
    return %arg0, %c0_i32 : i32, i32
  }
  func.func @transform_1(%arg0: i32) -> (i32, i32) {
    %c0_i32 = arith.constant 0 : i32
    %c0_i32_0 = arith.constant 0 : i32
    %c0_i32_1 = arith.constant 0 : i32
    return %c0_i32, %c0_i32_0 : i32, i32
  }
  func.func @transform_2(%arg0: i32) -> (i32, i32) {
    %c0_i32 = arith.constant 0 : i32
    %c0_i32_0 = arith.constant 0 : i32
    %c0_i32_1 = arith.constant 0 : i32
    return %c0_i32, %c0_i32_0 : i32, i32
  }
  func.func @transform_3(%arg0: i32) -> (i32, i32) {
    %c0_i32 = arith.constant 0 : i32
    %c0_i32_0 = arith.constant 0 : i32
    %c0_i32_1 = arith.constant 0 : i32
    return %c0_i32, %c0_i32_0 : i32, i32
  }
  func.func @transform_4(%arg0: i32) -> (i32, i32) {
    %c0_i32 = arith.constant 0 : i32
    %c0_i32_0 = arith.constant 0 : i32
    %c0_i32_1 = arith.constant 0 : i32
    return %c0_i32, %c0_i32_0 : i32, i32
  }
  func.func @transform_5(%arg0: i32) -> (i32, i32) {
    %c0_i32 = arith.constant 0 : i32
    %c0_i32_0 = arith.constant 0 : i32
    %c0_i32_1 = arith.constant 0 : i32
    return %c0_i32, %c0_i32_0 : i32, i32
  }
  func.func @transform_6(%arg0: i32) -> (i32, i32) {
    %c0_i32 = arith.constant 0 : i32
    %c0_i32_0 = arith.constant 0 : i32
    %c0_i32_1 = arith.constant 0 : i32
    return %c0_i32, %c0_i32_0 : i32, i32
  }
  func.func @transform_7(%arg0: i32) -> (i32, i32) {
    %c0_i32 = arith.constant 0 : i32
    %c0_i32_0 = arith.constant 0 : i32
    return %arg0, %c0_i32 : i32, i32
  }
}

module attributes {stable_mosaic.version = 11 : i64} {
  func.func @ffn_fused_kernel(%arg0: i32, %arg1: memref<256x128xbf16, #tpu.memory_space<vmem>>, %arg2: memref<128x128xbf16, #tpu.memory_space<vmem>>, %arg3: memref<1x128xbf16, #tpu.memory_space<vmem>>, %arg4: memref<128x128xbf16, #tpu.memory_space<vmem>>, %arg5: memref<1x128xbf16, #tpu.memory_space<vmem>>, %arg6: memref<128x128xbf16, #tpu.memory_space<vmem>>, %arg7: memref<1x128xbf16, #tpu.memory_space<vmem>>, %arg8: memref<256x128xbf16, #tpu.memory_space<vmem>>) attributes {dimension_semantics = [#tpu.dimension_semantics<parallel>], iteration_bounds = array<i64: 2>, scalar_prefetch = 0 : i64, scratch_operands = 0 : i64, tpu.core_type = #tpu.core_type<tc>, window_params = [{transform_indices = @transform_0, window_bounds = array<i64: 256, 128>}, {pipeline_mode = #tpu.pipeline_mode<synchronous>, transform_indices = @transform_1, window_bounds = array<i64: 128, 128>}, {pipeline_mode = #tpu.pipeline_mode<synchronous>, transform_indices = @transform_2, window_bounds = array<i64: 1, 128>}, {pipeline_mode = #tpu.pipeline_mode<synchronous>, transform_indices = @transform_3, window_bounds = array<i64: 128, 128>}, {pipeline_mode = #tpu.pipeline_mode<synchronous>, transform_indices = @transform_4, window_bounds = array<i64: 1, 128>}, {pipeline_mode = #tpu.pipeline_mode<synchronous>, transform_indices = @transform_5, window_bounds = array<i64: 128, 128>}, {pipeline_mode = #tpu.pipeline_mode<synchronous>, transform_indices = @transform_6, window_bounds = array<i64: 1, 128>}, {transform_indices = @transform_7, window_bounds = array<i64: 256, 128>}]} {
    %c0 = arith.constant 0 : index
    %c0_0 = arith.constant 0 : index
    %0 = vector.load %arg1[%c0, %c0_0] : memref<256x128xbf16, #tpu.memory_space<vmem>>, vector<256x128xbf16>
    %c0_1 = arith.constant 0 : index
    %c0_2 = arith.constant 0 : index
    %1 = vector.load %arg2[%c0_1, %c0_2] : memref<128x128xbf16, #tpu.memory_space<vmem>>, vector<128x128xbf16>
    %c0_3 = arith.constant 0 : index
    %c0_4 = arith.constant 0 : index
    %2 = vector.load %arg3[%c0_3, %c0_4] : memref<1x128xbf16, #tpu.memory_space<vmem>>, vector<1x128xbf16>
    %cst = arith.constant dense<0.000000e+00> : vector<256x128xf32>
    %3 = tpu.matmul %0, %1, %cst {dimension_numbers = #tpu.dot_dimension_numbers<[1], [0], [0], [1], [0, 0, 1, 1], [], []>} : vector<256x128xbf16>, vector<128x128xbf16>, vector<256x128xf32> -> vector<256x128xf32>
    %4 = arith.extf %2 : vector<1x128xbf16> to vector<1x128xf32>
    %5 = vector.broadcast %4 : vector<1x128xf32> to vector<256x128xf32>
    %6 = arith.addf %3, %5 : vector<256x128xf32>
    %7 = arith.truncf %6 : vector<256x128xf32> to vector<256x128xbf16>
    %c0_5 = arith.constant 0 : index
    %c0_6 = arith.constant 0 : index
    %8 = vector.load %arg4[%c0_5, %c0_6] : memref<128x128xbf16, #tpu.memory_space<vmem>>, vector<128x128xbf16>
    %c0_7 = arith.constant 0 : index
    %c0_8 = arith.constant 0 : index
    %9 = vector.load %arg5[%c0_7, %c0_8] : memref<1x128xbf16, #tpu.memory_space<vmem>>, vector<1x128xbf16>
    %cst_9 = arith.constant dense<0.000000e+00> : vector<256x128xf32>
    %10 = tpu.matmul %7, %8, %cst_9 {dimension_numbers = #tpu.dot_dimension_numbers<[1], [0], [0], [1], [0, 0, 1, 1], [], []>} : vector<256x128xbf16>, vector<128x128xbf16>, vector<256x128xf32> -> vector<256x128xf32>
    %11 = arith.extf %9 : vector<1x128xbf16> to vector<1x128xf32>
    %12 = vector.broadcast %11 : vector<1x128xf32> to vector<256x128xf32>
    %13 = arith.addf %10, %12 : vector<256x128xf32>
    %14 = arith.truncf %13 : vector<256x128xf32> to vector<256x128xbf16>
    %c0_10 = arith.constant 0 : index
    %c0_11 = arith.constant 0 : index
    %15 = vector.load %arg6[%c0_10, %c0_11] : memref<128x128xbf16, #tpu.memory_space<vmem>>, vector<128x128xbf16>
    %c0_12 = arith.constant 0 : index
    %c0_13 = arith.constant 0 : index
    %16 = vector.load %arg7[%c0_12, %c0_13] : memref<1x128xbf16, #tpu.memory_space<vmem>>, vector<1x128xbf16>
    %cst_14 = arith.constant dense<0.000000e+00> : vector<256x128xf32>
    %17 = tpu.matmul %14, %15, %cst_14 {dimension_numbers = #tpu.dot_dimension_numbers<[1], [0], [0], [1], [0, 0, 1, 1], [], []>} : vector<256x128xbf16>, vector<128x128xbf16>, vector<256x128xf32> -> vector<256x128xf32>
    %18 = arith.extf %16 : vector<1x128xbf16> to vector<1x128xf32>
    %19 = vector.broadcast %18 : vector<1x128xf32> to vector<256x128xf32>
    %20 = arith.addf %17, %19 : vector<256x128xf32>
    %21 = arith.truncf %20 : vector<256x128xf32> to vector<256x128xbf16>
    %c0_15 = arith.constant 0 : index
    %c0_16 = arith.constant 0 : index
    %22 = vector.load %arg8[%c0_15, %c0_16] : memref<256x128xbf16, #tpu.memory_space<vmem>>, vector<256x128xbf16>
    tpu.vector_store %arg8[%c0_15, %c0_16], %21 {strides = array<i32>} : memref<256x128xbf16, #tpu.memory_space<vmem>>, vector<256x128xbf16>,
    return
  }
  func.func @transform_0(%arg0: i32) -> (i32, i32) {
    %c0_i32 = arith.constant 0 : i32
    %c0_i32_0 = arith.constant 0 : i32
    return %arg0, %c0_i32 : i32, i32
  }
  func.func @transform_1(%arg0: i32) -> (i32, i32) {
    %c0_i32 = arith.constant 0 : i32
    %c0_i32_0 = arith.constant 0 : i32
    %c0_i32_1 = arith.constant 0 : i32
    return %c0_i32, %c0_i32_0 : i32, i32
  }
  func.func @transform_2(%arg0: i32) -> (i32, i32) {
    %c0_i32 = arith.constant 0 : i32
    %c0_i32_0 = arith.constant 0 : i32
    %c0_i32_1 = arith.constant 0 : i32
    return %c0_i32, %c0_i32_0 : i32, i32
  }
  func.func @transform_3(%arg0: i32) -> (i32, i32) {
    %c0_i32 = arith.constant 0 : i32
    %c0_i32_0 = arith.constant 0 : i32
    %c0_i32_1 = arith.constant 0 : i32
    return %c0_i32, %c0_i32_0 : i32, i32
  }
  func.func @transform_4(%arg0: i32) -> (i32, i32) {
    %c0_i32 = arith.constant 0 : i32
    %c0_i32_0 = arith.constant 0 : i32
    %c0_i32_1 = arith.constant 0 : i32
    return %c0_i32, %c0_i32_0 : i32, i32
  }
  func.func @transform_5(%arg0: i32) -> (i32, i32) {
    %c0_i32 = arith.constant 0 : i32
    %c0_i32_0 = arith.constant 0 : i32
    %c0_i32_1 = arith.constant 0 : i32
    return %c0_i32, %c0_i32_0 : i32, i32
  }
  func.func @transform_6(%arg0: i32) -> (i32, i32) {
    %c0_i32 = arith.constant 0 : i32
    %c0_i32_0 = arith.constant 0 : i32
    %c0_i32_1 = arith.constant 0 : i32
    return %c0_i32, %c0_i32_0 : i32, i32
  }
  func.func @transform_7(%arg0: i32) -> (i32, i32) {
    %c0_i32 = arith.constant 0 : i32
    %c0_i32_0 = arith.constant 0 : i32
    return %arg0, %c0_i32 : i32, i32
  }
}

</mosaic_0001>

<llo_original>
// kernel: tpu_custom_call.1
$region0: #{tpu_custom_call.1}
  #allocation0 [shape = 'u32[]', space=smem, size = 0x4, offset = 0x4, fixed_abs, tag = 'smem constant byte address 0x4 - core index']
  #allocation1 [shape = 'u32[144,128]{1,0:T(1,128)}', space=vmem, size = 0x12000, scoped, tag = 'internal scratch']
  %s0 = inlined_call_operand.hbm [shape: bf16[512,128], index: 0, kind: input, shape index: {}]
  %s1 = inlined_call_operand.hbm [shape: bf16[128,128], index: 1, kind: input, shape index: {}]
  %s2 = inlined_call_operand.vmem [shape: bf16[1,128], index: 2, kind: input, shape index: {}]
  %s3 = inlined_call_operand.hbm [shape: bf16[128,128], index: 3, kind: input, shape index: {}]
  %s4 = inlined_call_operand.vmem [shape: bf16[1,128], index: 4, kind: input, shape index: {}]
  %s5 = inlined_call_operand.hbm [shape: bf16[128,128], index: 5, kind: input, shape index: {}]
  %s6 = inlined_call_operand.vmem [shape: bf16[1,128], index: 6, kind: input, shape index: {}]
  %s7 = inlined_call_operand.hbm [shape: bf16[512,128], index: 7, kind: output, shape index: {}]
  %s8 = sld [smem:[#allocation0]]
  $region77: #{tpu_custom_call.1} parent=0
    _
  %s10 = ssub.s32 1, %s8
  %s11 = scalar_select 0, %s10, %s8
  $region1: #{tpu_custom_call.1} parent=0
    #allocation2 [shape = 'u8[131072]{0}', space=vmem, size = 0x20000, scoped, tag = 'input window, operand 0']
    #allocation3 [shape = 's32[2]{0}', space=sflag, size = 0x8, scoped, tag = 'scoped memory for tpu_custom_call.1']
    #allocation4 [shape = 's32[2]{0}', space=sflag, size = 0x8, scoped, tag = 'scoped memory for tpu_custom_call.1']
    #allocation5 [shape = 'u8[32768]{0}', space=vmem, size = 0x8000, scoped, tag = 'input window, operand 1, single buffered']
    #allocation6 [shape = 's32[1]{0}', space=sflag, size = 0x4, scoped, tag = 'scoped memory for tpu_custom_call.1']
    #allocation7 [shape = 'u8[32768]{0}', space=vmem, size = 0x8000, scoped, tag = 'input window, operand 3, single buffered']
    #allocation8 [shape = 'u8[32768]{0}', space=vmem, size = 0x8000, scoped, tag = 'input window, operand 5, single buffered']
    #allocation9 [shape = 's32[1]{0}', space=sflag, size = 0x4, scoped, tag = 'scoped memory for tpu_custom_call.1']
    #allocation10 [shape = 'u8[131072]{0}', space=vmem, size = 0x20000, scoped, tag = 'output window, operand 0']
    %12 = vsyncpa [#allocation3], 0
    %s13 = scalar_lea.sflag [#allocation3], 1
    %14 = vsyncpa %s13, 0
    %15 = vsyncpa [#allocation6], 0
    %16 = vsyncpa [#allocation9], 0
    %17 = vsyncpa [#allocation4], 0
    %s18 = scalar_lea.sflag [#allocation4], 1
    %19 = vsyncpa %s18, 0
    loop: start=0, step=1, limit=4
    $region2: #{tpu_custom_call.1} parent=1 // loop_pre_header
      _
    $region3: #{tpu_custom_call.1} parent=1 // loop_header
      %s21 = sphi 0, %s25
      %p22 = scmp.ge.s32.totalorder %s21, 4
      %s31 = sphi 0, %s33
      %s34 = sphi 0, %s31
      %s35 = sphi 0, %s34
      %s51 = sphi 0, %s35
      %s55 = sphi 0, %s55
      %s57 = sphi 0, %s55
      %s58 = sphi 0, %s57
      %s72 = sphi 0, %s58
      %s76 = sphi 0, %s76
      %s78 = sphi 0, %s76
      %s79 = sphi 0, %s78
      %s93 = sphi 0, %s79
      %s97 = sphi 0, %s97
      %s99 = sphi 0, %s97
      %s100 = sphi 0, %s99
      %s114 = sphi 0, %s100
      %s118 = sphi 0, %s118
      %s120 = sphi 0, %s118
      %s121 = sphi 0, %s120
      %s135 = sphi 0, %s121
      %s139 = sphi 0, %s139
      %s141 = sphi 0, %s139
      %s142 = sphi 0, %s141
      %s156 = sphi 0, %s142
      %s160 = sphi 0, %s160
      %s162 = sphi 0, %s160
      %s163 = sphi 0, %s162
      %s177 = sphi 0, %s163
      %s183 = sphi 0, %s185
      %s186 = sphi 0, %s183
      %s187 = sphi 0, %s186
      %s203 = sphi 0, %s187
    $region4: #{tpu_custom_call.1} parent=1 // loop_header_branch
      %24 = sbr.rel (%p22) target = $region8
    $region5: #{tpu_custom_call.1} parent=1 // loop_body
      %s26 = ssub.s32 %s21, 1
      %s27 = ssub.s32 %s21, 2
      %s28 = sadd.s32 %s21, 1
      %s29 = ssub.s32 %s21, %s28
      %p30 = scmp.eq.s32.totalorder %s29, 0
      %s32 = sadd.s32 %s31, 1
      %s33 = scalar_select %p30, %s31, %s32
      %p36 = pneg %p30
      %p37 = scmp.eq.s32.totalorder %s21, 1
      %p38 = por %p36, %p37
      %p39 = scmp.ne.s32.totalorder %s31, %s34
      %p40 = scmp.eq.s32.totalorder %s21, 0
      %p41 = por %p39, %p40
      %p42 = scmp.ne.s32.totalorder %s31, %s34
      %p43 = scmp.eq.s32.totalorder %s26, 1
      %p44 = por %p42, %p43
      %p45 = scmp.ne.s32.totalorder %s34, %s35
      %p46 = scmp.eq.s32.totalorder %s26, 0
      %p47 = por %p45, %p46
      %p48 = scmp.ne.s32.totalorder %s34, %s35
      %p49 = scmp.eq.s32.totalorder %s27, 1
      %p50 = por %p48, %p49
      %p52 = scmp.ne.s32.totalorder %s35, %s51
      %p53 = scmp.eq.s32.totalorder %s27, 0
      %p54 = por %p52, %p53
      %s56 = sadd.s32 %s55, 1
      %p59 = scmp.eq.s32.totalorder %s21, 1
      %p60 = scmp.ne.s32.totalorder %s55, %s57
      %p61 = scmp.eq.s32.totalorder %s21, 0
      %p62 = por %p60, %p61
      %p63 = scmp.ne.s32.totalorder %s55, %s57
      %p64 = scmp.eq.s32.totalorder %s26, 1
      %p65 = por %p63, %p64
      %p66 = scmp.ne.s32.totalorder %s57, %s58
      %p67 = scmp.eq.s32.totalorder %s26, 0
      %p68 = por %p66, %p67
      %p69 = scmp.ne.s32.totalorder %s57, %s58
      %p70 = scmp.eq.s32.totalorder %s27, 1
      %p71 = por %p69, %p70
      %p73 = scmp.ne.s32.totalorder %s58, %s72
      %p74 = scmp.eq.s32.totalorder %s27, 0
      %p75 = por %p73, %p74
      %s77 = sadd.s32 %s76, 1
      %p80 = scmp.eq.s32.totalorder %s21, 1
      %p81 = scmp.ne.s32.totalorder %s76, %s78
      %p82 = scmp.eq.s32.totalorder %s21, 0
      %p83 = por %p81, %p82
      %p84 = scmp.ne.s32.totalorder %s76, %s78
      %p85 = scmp.eq.s32.totalorder %s26, 1
      %p86 = por %p84, %p85
      %p87 = scmp.ne.s32.totalorder %s78, %s79
      %p88 = scmp.eq.s32.totalorder %s26, 0
      %p89 = por %p87, %p88
      %p90 = scmp.ne.s32.totalorder %s78, %s79
      %p91 = scmp.eq.s32.totalorder %s27, 1
      %p92 = por %p90, %p91
      %p94 = scmp.ne.s32.totalorder %s79, %s93
      %p95 = scmp.eq.s32.totalorder %s27, 0
      %p96 = por %p94, %p95
      %s98 = sadd.s32 %s97, 1
      %p101 = scmp.eq.s32.totalorder %s21, 1
      %p102 = scmp.ne.s32.totalorder %s97, %s99
      %p103 = scmp.eq.s32.totalorder %s21, 0
      %p104 = por %p102, %p103
      %p105 = scmp.ne.s32.totalorder %s97, %s99
      %p106 = scmp.eq.s32.totalorder %s26, 1
      %p107 = por %p105, %p106
      %p108 = scmp.ne.s32.totalorder %s99, %s100
      %p109 = scmp.eq.s32.totalorder %s26, 0
      %p110 = por %p108, %p109
      %p111 = scmp.ne.s32.totalorder %s99, %s100
      %p112 = scmp.eq.s32.totalorder %s27, 1
      %p113 = por %p111, %p112
      %p115 = scmp.ne.s32.totalorder %s100, %s114
      %p116 = scmp.eq.s32.totalorder %s27, 0
      %p117 = por %p115, %p116
      %s119 = sadd.s32 %s118, 1
      %p122 = scmp.eq.s32.totalorder %s21, 1
      %p123 = scmp.ne.s32.totalorder %s118, %s120
      %p124 = scmp.eq.s32.totalorder %s21, 0
      %p125 = por %p123, %p124
      %p126 = scmp.ne.s32.totalorder %s118, %s120
      %p127 = scmp.eq.s32.totalorder %s26, 1
      %p128 = por %p126, %p127
      %p129 = scmp.ne.s32.totalorder %s120, %s121
      %p130 = scmp.eq.s32.totalorder %s26, 0
      %p131 = por %p129, %p130
      %p132 = scmp.ne.s32.totalorder %s120, %s121
      %p133 = scmp.eq.s32.totalorder %s27, 1
      %p134 = por %p132, %p133
      %p136 = scmp.ne.s32.totalorder %s121, %s135
      %p137 = scmp.eq.s32.totalorder %s27, 0
      %p138 = por %p136, %p137
      %s140 = sadd.s32 %s139, 1
      %p143 = scmp.eq.s32.totalorder %s21, 1
      %p144 = scmp.ne.s32.totalorder %s139, %s141
      %p145 = scmp.eq.s32.totalorder %s21, 0
      %p146 = por %p144, %p145
      %p147 = scmp.ne.s32.totalorder %s139, %s141
      %p148 = scmp.eq.s32.totalorder %s26, 1
      %p149 = por %p147, %p148
      %p150 = scmp.ne.s32.totalorder %s141, %s142
      %p151 = scmp.eq.s32.totalorder %s26, 0
      %p152 = por %p150, %p151
      %p153 = scmp.ne.s32.totalorder %s141, %s142
      %p154 = scmp.eq.s32.totalorder %s27, 1
      %p155 = por %p153, %p154
      %p157 = scmp.ne.s32.totalorder %s142, %s156
      %p158 = scmp.eq.s32.totalorder %s27, 0
      %p159 = por %p157, %p158
      %s161 = sadd.s32 %s160, 1
      %p164 = scmp.eq.s32.totalorder %s21, 1
      %p165 = scmp.ne.s32.totalorder %s160, %s162
      %p166 = scmp.eq.s32.totalorder %s21, 0
      %p167 = por %p165, %p166
      %p168 = scmp.ne.s32.totalorder %s160, %s162
      %p169 = scmp.eq.s32.totalorder %s26, 1
      %p170 = por %p168, %p169
      %p171 = scmp.ne.s32.totalorder %s162, %s163
      %p172 = scmp.eq.s32.totalorder %s26, 0
      %p173 = por %p171, %p172
      %p174 = scmp.ne.s32.totalorder %s162, %s163
      %p175 = scmp.eq.s32.totalorder %s27, 1
      %p176 = por %p174, %p175
      %p178 = scmp.ne.s32.totalorder %s163, %s177
      %p179 = scmp.eq.s32.totalorder %s27, 0
      %p180 = por %p178, %p179
      %s181 = ssub.s32 %s21, %s28
      %p182 = scmp.eq.s32.totalorder %s181, 0
      %s184 = sadd.s32 %s183, 1
      %s185 = scalar_select %p182, %s183, %s184
      %p188 = pneg %p182
      %p189 = scmp.eq.s32.totalorder %s21, 1
      %p190 = por %p188, %p189
      %p191 = scmp.ne.s32.totalorder %s183, %s186
      %p192 = scmp.eq.s32.totalorder %s21, 0
      %p193 = por %p191, %p192
      %p194 = scmp.ne.s32.totalorder %s183, %s186
      %p195 = scmp.eq.s32.totalorder %s26, 1
      %p196 = por %p194, %p195
      %p197 = scmp.ne.s32.totalorder %s186, %s187
      %p198 = scmp.eq.s32.totalorder %s26, 0
      %p199 = por %p197, %p198
      %p200 = scmp.ne.s32.totalorder %s186, %s187
      %p201 = scmp.eq.s32.totalorder %s27, 1
      %p202 = por %p200, %p201
      %p204 = scmp.ne.s32.totalorder %s187, %s203
      %p205 = scmp.eq.s32.totalorder %s27, 0
      %p206 = por %p204, %p205
      %p207 = scmp.le.s32.totalorder 1, %s21
      %p208 = scmp.lt.s32.totalorder %s21, 3
      %p209 = pnand %p207, %p208
      %p210 = pneg %p209
      // Predicated region
      $region9: #{tpu_custom_call.1} parent=5 // pred_check
        _
      $region10: #{tpu_custom_call.1} parent=5 // pred_check_branch
        %212 = sbr.rel (%p209) target = $region12
      $region11: #{tpu_custom_call.1} parent=5 // pred_region
        %s213 = ssub.s32 %s21, 1
        // Predicated region
        $region13: #{tpu_custom_call.1} parent=11 // pred_check
          %p214 = pneg %p68
        $region14: #{tpu_custom_call.1} parent=11 // pred_check_branch
          %216 = sbr.rel (%p214) target = $region16
        $region15: #{tpu_custom_call.1} parent=11 // pred_region
          %s218 = ssub.s32 1024, 1024
          %219 = vsyncadd [#allocation6], %s218
          %s220 = sshll.u32 [#allocation5], 4
          %s221 = int_to_ptr.vmem [resolvable:$true] %s220
          %226 = dma.hbm_to_vmem [thread:$0]  %s1, 1024, %s221, [#allocation6], 64, 64, 4
        $region16: #{tpu_custom_call.1} parent=11 // pred_fallthru
          _
        // Predicated region
        $region17: #{tpu_custom_call.1} parent=11 // pred_check
          %p227 = pneg %p89
        $region18: #{tpu_custom_call.1} parent=11 // pred_check_branch
          %229 = sbr.rel (%p227) target = $region20
        $region19: #{tpu_custom_call.1} parent=11 // pred_region
          _
        $region20: #{tpu_custom_call.1} parent=11 // pred_fallthru
          _
        // Predicated region
        $region21: #{tpu_custom_call.1} parent=11 // pred_check
          %p230 = pneg %p110
        $region22: #{tpu_custom_call.1} parent=11 // pred_check_branch
          %232 = sbr.rel (%p230) target = $region24
        $region23: #{tpu_custom_call.1} parent=11 // pred_region
          %s234 = ssub.s32 1024, 1024
          %235 = vsyncadd [#allocation6], %s234
          %s236 = sshll.u32 [#allocation7], 4
          %s237 = int_to_ptr.vmem [resolvable:$true] %s236
          %242 = dma.hbm_to_vmem [thread:$0]  %s3, 1024, %s237, [#allocation6], 64, 64, 4
        $region24: #{tpu_custom_call.1} parent=11 // pred_fallthru
          _
        // Predicated region
        $region25: #{tpu_custom_call.1} parent=11 // pred_check
          %p243 = pneg %p131
        $region26: #{tpu_custom_call.1} parent=11 // pred_check_branch
          %245 = sbr.rel (%p243) target = $region28
        $region27: #{tpu_custom_call.1} parent=11 // pred_region
          _
        $region28: #{tpu_custom_call.1} parent=11 // pred_fallthru
          _
        // Predicated region
        $region29: #{tpu_custom_call.1} parent=11 // pred_check
          %p246 = pneg %p152
        $region30: #{tpu_custom_call.1} parent=11 // pred_check_branch
          %248 = sbr.rel (%p246) target = $region32
        $region31: #{tpu_custom_call.1} parent=11 // pred_region
          %s250 = ssub.s32 1024, 1024
          %251 = vsyncadd [#allocation9], %s250
          %s252 = sshll.u32 [#allocation8], 4
          %s253 = int_to_ptr.vmem [resolvable:$true] %s252
          %258 = dma.hbm_to_vmem [thread:$0]  %s5, 1024, %s253, [#allocation9], 64, 64, 4
        $region32: #{tpu_custom_call.1} parent=11 // pred_fallthru
          _
        // Predicated region
        $region33: #{tpu_custom_call.1} parent=11 // pred_check
          %p259 = pneg %p173
        $region34: #{tpu_custom_call.1} parent=11 // pred_check_branch
          %261 = sbr.rel (%p259) target = $region36
        $region35: #{tpu_custom_call.1} parent=11 // pred_region
          _
        $region36: #{tpu_custom_call.1} parent=11 // pred_fallthru
          _
      $region12: #{tpu_custom_call.1} parent=5 // pred_fallthru
        _
      %p262 = scmp.lt.s32.totalorder %s21, 2
      // Predicated region
      $region37: #{tpu_custom_call.1} parent=5 // pred_check
        %p263 = pneg %p262
      $region38: #{tpu_custom_call.1} parent=5 // pred_check_branch
        %265 = sbr.rel (%p263) target = $region40
      $region39: #{tpu_custom_call.1} parent=5 // pred_region
        // Predicated region
        $region41: #{tpu_custom_call.1} parent=39 // pred_check
          %p266 = pneg %p41
        $region42: #{tpu_custom_call.1} parent=39 // pred_check_branch
          %268 = sbr.rel (%p266) target = $region44
        $region43: #{tpu_custom_call.1} parent=39 // pred_region
          %s269 = sand.u32 %s31, 1
          %s270 = scalar_lea.sflag [#allocation3], %s269
          %s271 = sand.u32 %s31, 1
          %s272 = smul.addr %s271, 128
          %s273 = scalar_lea.vmem [#allocation2], %s272
          %s274 = smul.u32 32, %s21
          %s276 = ssub.s32 2048, 2048
          %277 = vsyncadd %s270, %s276
          %s278 = smul.addr %s274, 64
          %s279 = scalar_lea.hbm %s0, %s278
          %s280 = sshll.u32 %s273, 4
          %s281 = int_to_ptr.vmem [resolvable:$true] %s280
          %286 = dma.hbm_to_vmem [thread:$0]  %s279, 2048, %s281, %s270, 64, 64, 4
        $region44: #{tpu_custom_call.1} parent=39 // pred_fallthru
          _
      $region40: #{tpu_custom_call.1} parent=5 // pred_fallthru
        _
      %p287 = scmp.le.s32.totalorder 1, %s21
      %p288 = scmp.lt.s32.totalorder %s21, 3
      %p289 = pnand %p287, %p288
      %p290 = pneg %p289
      // Predicated region
      $region45: #{tpu_custom_call.1} parent=5 // pred_check
        _
      $region46: #{tpu_custom_call.1} parent=5 // pred_check_branch
        %292 = sbr.rel (%p289) target = $region48
      $region47: #{tpu_custom_call.1} parent=5 // pred_region
        %s293 = ssub.s32 %s21, 1
        %s294 = sand.u32 %s34, 1
        %s295 = scalar_lea.sflag [#allocation3], %s294
        %s296 = sand.u32 %s34, 1
        %s297 = smul.addr %s296, 128
        %s298 = scalar_lea.vmem [#allocation2], %s297
        // Predicated region
        $region49: #{tpu_custom_call.1} parent=47 // pred_check
          %p299 = pneg %p47
        $region50: #{tpu_custom_call.1} parent=47 // pred_check_branch
          %301 = sbr.rel (%p299) target = $region52
        $region51: #{tpu_custom_call.1} parent=47 // pred_region
          %302 = dma.done %s295, 2048
        $region52: #{tpu_custom_call.1} parent=47 // pred_fallthru
          _
        // Predicated region
        $region53: #{tpu_custom_call.1} parent=47 // pred_check
          %p303 = pneg %p68
        $region54: #{tpu_custom_call.1} parent=47 // pred_check_branch
          %305 = sbr.rel (%p303) target = $region56
        $region55: #{tpu_custom_call.1} parent=47 // pred_region
          %306 = dma.done [#allocation6], 1024
        $region56: #{tpu_custom_call.1} parent=47 // pred_fallthru
          _
        // Predicated region
        $region57: #{tpu_custom_call.1} parent=47 // pred_check
          %p307 = pneg %p110
        $region58: #{tpu_custom_call.1} parent=47 // pred_check_branch
          %309 = sbr.rel (%p307) target = $region60
        $region59: #{tpu_custom_call.1} parent=47 // pred_region
          %310 = dma.done [#allocation6], 1024
        $region60: #{tpu_custom_call.1} parent=47 // pred_fallthru
          _
        // Predicated region
        $region61: #{tpu_custom_call.1} parent=47 // pred_check
          %p311 = pneg %p152
        $region62: #{tpu_custom_call.1} parent=47 // pred_check_branch
          %313 = sbr.rel (%p311) target = $region64
        $region63: #{tpu_custom_call.1} parent=47 // pred_region
          %314 = dma.done [#allocation9], 1024
        $region64: #{tpu_custom_call.1} parent=47 // pred_fallthru
          _
        %s315 = sand.u32 %s34, 1
        %s316 = scalar_lea.sflag [#allocation3], %s315
        %s317 = sand.u32 %s34, 1
        %s318 = smul.addr %s317, 128
        %s319 = scalar_lea.vmem [#allocation2], %s318
        %p320 = pneg %p47
        %p321 = pneg %p44
        %p322 = pneg %p68
        %p323 = pneg %p65
        %p324 = pneg %p89
        %p325 = pneg %p86
        %p326 = pneg %p110
        %p327 = pneg %p107
        %p328 = pneg %p131
        %p329 = pneg %p128
        %p330 = pneg %p152
        %p331 = pneg %p149
        %p332 = pneg %p173
        %p333 = pneg %p170
        %p334 = pneg %p199
        %p335 = pneg %p196
        %s336 = sand.u32 %s186, 1
        %s337 = scalar_lea.sflag [#allocation4], %s336
        %s338 = sand.u32 %s186, 1
        %s339 = smul.addr %s338, 128
        %s340 = scalar_lea.vmem [#allocation10], %s339
        %s341 = smul.u32 32, %s26
        %s342 = smul.u32 32, %s26
        %v344 = vld [vmem:[%s298] sm:$0xf]
        %v345 = vld [vmem:[%s298 + $0x4] sm:$0xf]
        %v346 = vld [vmem:[%s298 + $0x8] sm:$0xf]
        %v347 = vld [vmem:[%s298 + $0xc] sm:$0xf]
        %v348 = vld [vmem:[%s298 + $0x10] sm:$0xf]
        %v349 = vld [vmem:[%s298 + $0x14] sm:$0xf]
        %v350 = vld [vmem:[%s298 + $0x18] sm:$0xf]
        %v351 = vld [vmem:[%s298 + $0x1c] sm:$0xf]
        %v352 = vld [vmem:[%s298 + $0x20] sm:$0xf]
        %v353 = vld [vmem:[%s298 + $0x24] sm:$0xf]
        %v354 = vld [vmem:[%s298 + $0x28] sm:$0xf]
        %v355 = vld [vmem:[%s298 + $0x2c] sm:$0xf]
        %v356 = vld [vmem:[%s298 + $0x30] sm:$0xf]
        %v357 = vld [vmem:[%s298 + $0x34] sm:$0xf]
        %v358 = vld [vmem:[%s298 + $0x38] sm:$0xf]
        %v359 = vld [vmem:[%s298 + $0x3c] sm:$0xf]
        %v360 = vld [vmem:[%s298 + $0x40] sm:$0xf]
        %v361 = vld [vmem:[%s298 + $0x44] sm:$0xf]
        %v362 = vld [vmem:[%s298 + $0x48] sm:$0xf]
        %v363 = vld [vmem:[%s298 + $0x4c] sm:$0xf]
        %v364 = vld [vmem:[%s298 + $0x50] sm:$0xf]
        %v365 = vld [vmem:[%s298 + $0x54] sm:$0xf]
        %v366 = vld [vmem:[%s298 + $0x58] sm:$0xf]
        %v367 = vld [vmem:[%s298 + $0x5c] sm:$0xf]
        %v368 = vld [vmem:[%s298 + $0x60] sm:$0xf]
        %v369 = vld [vmem:[%s298 + $0x64] sm:$0xf]
        %v370 = vld [vmem:[%s298 + $0x68] sm:$0xf]
        %v371 = vld [vmem:[%s298 + $0x6c] sm:$0xf]
        %v372 = vld [vmem:[%s298 + $0x70] sm:$0xf]
        %v373 = vld [vmem:[%s298 + $0x74] sm:$0xf]
        %v374 = vld [vmem:[%s298 + $0x78] sm:$0xf]
        %v375 = vld [vmem:[%s298 + $0x7c] sm:$0xf]
        %v376 = vld [vmem:[#allocation5] sm:$0xf]
        %v377 = vld [vmem:[#allocation5 + $0x4] sm:$0xf]
        %v378 = vld [vmem:[#allocation5 + $0x8] sm:$0xf]
        %v379 = vld [vmem:[#allocation5 + $0xc] sm:$0xf]
        %v380 = vld [vmem:[#allocation5 + $0x10] sm:$0xf]
        %v381 = vld [vmem:[#allocation5 + $0x14] sm:$0xf]
        %v382 = vld [vmem:[#allocation5 + $0x18] sm:$0xf]
        %v383 = vld [vmem:[#allocation5 + $0x1c] sm:$0xf]
        %v384 = vld [vmem:[#allocation5 + $0x20] sm:$0xf]
        %v385 = vld [vmem:[#allocation5 + $0x24] sm:$0xf]
        %v386 = vld [vmem:[#allocation5 + $0x28] sm:$0xf]
        %v387 = vld [vmem:[#allocation5 + $0x2c] sm:$0xf]
        %v388 = vld [vmem:[#allocation5 + $0x30] sm:$0xf]
        %v389 = vld [vmem:[#allocation5 + $0x34] sm:$0xf]
        %v390 = vld [vmem:[#allocation5 + $0x38] sm:$0xf]
        %v391 = vld [vmem:[#allocation5 + $0x3c] sm:$0xf]
        %v392 = vld [vmem:[%s2] sm:$0x1]
        %v393 = vunpack.c.l.bf16 %v392
        %v394 = vlaneseq
        %v395 = vshrl.u32 %v394, 7
        %v396 = vsub.s32 0, %v395
        %v397 = vrot.slane %v393, %v396
        %v430 = vunpack.c.l.b16 %v344
        %v431 = vunpack.c.l.b16 %v345
        %v432 = vunpack.c.l.b16 %v346
        %v433 = vunpack.c.l.b16 %v347
        %v434 = vunpack.c.l.b16 %v348
        %v435 = vunpack.c.l.b16 %v349
        %v436 = vunpack.c.l.b16 %v350
        %v437 = vunpack.c.l.b16 %v351
        %v438 = vunpack.c.l.b16 %v352
        %v439 = vunpack.c.l.b16 %v353
        %v440 = vunpack.c.l.b16 %v354
        %v441 = vunpack.c.l.b16 %v355
        %v442 = vunpack.c.l.b16 %v356
        %v443 = vunpack.c.l.b16 %v357
        %v444 = vunpack.c.l.b16 %v358
        %v445 = vunpack.c.l.b16 %v359
        %v446 = vunpack.c.l.b16 %v360
        %v447 = vunpack.c.l.b16 %v361
        %v448 = vunpack.c.l.b16 %v362
        %v449 = vunpack.c.l.b16 %v363
        %v450 = vunpack.c.l.b16 %v364
        %v451 = vunpack.c.l.b16 %v365
        %v452 = vunpack.c.l.b16 %v366
        %v453 = vunpack.c.l.b16 %v367
        %v454 = vunpack.c.l.b16 %v368
        %v455 = vunpack.c.l.b16 %v369
        %v456 = vunpack.c.l.b16 %v370
        %v457 = vunpack.c.l.b16 %v371
        %v458 = vunpack.c.l.b16 %v372
        %v459 = vunpack.c.l.b16 %v373
        %v460 = vunpack.c.l.b16 %v374
        %v461 = vunpack.c.l.b16 %v375
        %v462 = vpack.c.b16 %v431, %v430
        %v463 = vpack.c.b16 %v433, %v432
        %v464 = vpack.c.b16 %v435, %v434
        %v465 = vpack.c.b16 %v437, %v436
        %v466 = vpack.c.b16 %v439, %v438
        %v467 = vpack.c.b16 %v441, %v440
        %v468 = vpack.c.b16 %v443, %v442
        %v469 = vpack.c.b16 %v445, %v444
        %v470 = vpack.c.b16 %v447, %v446
        %v471 = vpack.c.b16 %v449, %v448
        %v472 = vpack.c.b16 %v451, %v450
        %v473 = vpack.c.b16 %v453, %v452
        %v474 = vpack.c.b16 %v455, %v454
        %v475 = vpack.c.b16 %v457, %v456
        %v476 = vpack.c.b16 %v459, %v458
        %v477 = vpack.c.b16 %v461, %v460
        %v510 = vunpack.c.l.b16 %v376
        %v511 = vunpack.c.l.b16 %v377
        %v512 = vunpack.c.l.b16 %v378
        %v513 = vunpack.c.l.b16 %v379
        %v514 = vunpack.c.l.b16 %v380
        %v515 = vunpack.c.l.b16 %v381
        %v516 = vunpack.c.l.b16 %v382
        %v517 = vunpack.c.l.b16 %v383
        %v518 = vunpack.c.l.b16 %v384
        %v519 = vunpack.c.l.b16 %v385
        %v520 = vunpack.c.l.b16 %v386
        %v521 = vunpack.c.l.b16 %v387
        %v522 = vunpack.c.l.b16 %v388
        %v523 = vunpack.c.l.b16 %v389
        %v524 = vunpack.c.l.b16 %v390
        %v525 = vunpack.c.l.b16 %v391
        %v526 = vpack.c.b16 %v511, %v510
        %v527 = vpack.c.b16 %v513, %v512
        %v528 = vpack.c.b16 %v515, %v514
        %v529 = vpack.c.b16 %v517, %v516
        %v530 = vpack.c.b16 %v519, %v518
        %v531 = vpack.c.b16 %v521, %v520
        %v532 = vpack.c.b16 %v523, %v522
        %v533 = vpack.c.b16 %v525, %v524
        %542 = vmatprep.subr.bf16.mxu0 0
        %543 = vmatpush1.bf16.msra.mxu0 %v533
        %544 = vmatprep.subr.bf16.mxu0 0
        %545 = vmatpush1.bf16.msra.mxu0 %v532
        %546 = vmatprep.subr.bf16.mxu0 0
        %547 = vmatpush1.bf16.msra.mxu0 %v531
        %548 = vmatprep.subr.bf16.mxu0 0
        %549 = vmatpush1.bf16.msra.mxu0 %v530
        %550 = vmatprep.subr.bf16.mxu0 0
        %551 = vmatpush1.bf16.msra.mxu0 %v529
        %552 = vmatprep.subr.bf16.mxu0 0
        %553 = vmatpush1.bf16.msra.mxu0 %v528
        %554 = vmatprep.subr.bf16.mxu0 0
        %555 = vmatpush1.bf16.msra.mxu0 %v527
        %556 = vmatprep.subr.bf16.mxu0 0
        %557 = vmatpush1.bf16.msra.mxu0 %v526
        %558 = vmatprep.subr.bf16.mxu0 0
        %559 = vmatpush2.bf16.msra.mxu0 0
        %560 = vmatprep.subr.bf16.mxu0 0
        %561 = vmatpush2.bf16.msra.mxu0 0
        %562 = vmatprep.subr.bf16.mxu0 0
        %563 = vmatpush2.bf16.msra.mxu0 0
        %564 = vmatprep.subr.bf16.mxu0 0
        %565 = vmatpush2.bf16.msra.mxu0 0
        %566 = vmatprep.subr.bf16.mxu0 0
        %567 = vmatpush2.bf16.msra.mxu0 0
        %568 = vmatprep.subr.bf16.mxu0 0
        %569 = vmatpush2.bf16.msra.mxu0 0
        %570 = vmatprep.subr.bf16.mxu0 0
        %571 = vmatpush2.bf16.msra.mxu0 0
        %572 = vmatprep.subr.bf16.mxu0 0
        %573 = vmatpush2.bf16.msra.mxu0 0
        %574 = vmatprep.mubr.bf16.mxu0 0
        %575 = vmatmul.mubr.bf16.gmra.mxu0 %v462
        %v576 = vpop.f32.mrf.mxu0
        %v577 = vadd.f32 %v397, %v576
        %v578 = vpop.f32.mrf.mxu0
        %v579 = vpop.f32.mrf.mxu0
        %v580 = vadd.f32 %v397, %v579
        %v581 = vpop.f32.mrf.mxu0
        %582 = vmatprep.mubr.bf16.mxu0 0
        %583 = vmatmul.mubr.bf16.gmra.mxu0 %v463
        %v584 = vpop.f32.mrf.mxu0
        %v585 = vadd.f32 %v397, %v584
        %v586 = vpop.f32.mrf.mxu0
        %v587 = vpop.f32.mrf.mxu0
        %v588 = vadd.f32 %v397, %v587
        %v589 = vpop.f32.mrf.mxu0
        %590 = vmatprep.mubr.bf16.mxu0 0
        %591 = vmatmul.mubr.bf16.gmra.mxu0 %v464
        %v592 = vpop.f32.mrf.mxu0
        %v593 = vadd.f32 %v397, %v592
        %v594 = vpop.f32.mrf.mxu0
        %v595 = vpop.f32.mrf.mxu0
        %v596 = vadd.f32 %v397, %v595
        %v597 = vpop.f32.mrf.mxu0
        %598 = vmatprep.mubr.bf16.mxu0 0
        %599 = vmatmul.mubr.bf16.gmra.mxu0 %v465
        %v600 = vpop.f32.mrf.mxu0
        %v601 = vadd.f32 %v397, %v600
        %v602 = vpop.f32.mrf.mxu0
        %v603 = vpop.f32.mrf.mxu0
        %v604 = vadd.f32 %v397, %v603
        %v605 = vpop.f32.mrf.mxu0
        %606 = vmatprep.mubr.bf16.mxu0 0
        %607 = vmatmul.mubr.bf16.gmra.mxu0 %v466
        %v608 = vpop.f32.mrf.mxu0
        %v609 = vadd.f32 %v397, %v608
        %v610 = vpop.f32.mrf.mxu0
        %v611 = vpop.f32.mrf.mxu0
        %v612 = vadd.f32 %v397, %v611
        %v613 = vpop.f32.mrf.mxu0
        %614 = vmatprep.mubr.bf16.mxu0 0
        %615 = vmatmul.mubr.bf16.gmra.mxu0 %v467
        %v616 = vpop.f32.mrf.mxu0
        %v617 = vadd.f32 %v397, %v616
        %v618 = vpop.f32.mrf.mxu0
        %v619 = vpop.f32.mrf.mxu0
        %v620 = vadd.f32 %v397, %v619
        %v621 = vpop.f32.mrf.mxu0
        %622 = vmatprep.mubr.bf16.mxu0 0
        %623 = vmatmul.mubr.bf16.gmra.mxu0 %v468
        %v624 = vpop.f32.mrf.mxu0
        %v625 = vadd.f32 %v397, %v624
        %v626 = vpop.f32.mrf.mxu0
        %v627 = vpop.f32.mrf.mxu0
        %v628 = vadd.f32 %v397, %v627
        %v629 = vpop.f32.mrf.mxu0
        %630 = vmatprep.mubr.bf16.mxu0 0
        %631 = vmatmul.mubr.bf16.gmra.mxu0 %v469
        %v632 = vpop.f32.mrf.mxu0
        %v633 = vadd.f32 %v397, %v632
        %v634 = vpop.f32.mrf.mxu0
        %v635 = vpop.f32.mrf.mxu0
        %v636 = vadd.f32 %v397, %v635
        %v637 = vpop.f32.mrf.mxu0
        %638 = vmatprep.mubr.bf16.mxu0 0
        %639 = vmatmul.mubr.bf16.gmra.mxu0 %v470
        %v640 = vpop.f32.mrf.mxu0
        %v641 = vadd.f32 %v397, %v640
        %v642 = vpop.f32.mrf.mxu0
        %v643 = vpop.f32.mrf.mxu0
        %v644 = vadd.f32 %v397, %v643
        %v645 = vpop.f32.mrf.mxu0
        %646 = vmatprep.mubr.bf16.mxu0 0
        %647 = vmatmul.mubr.bf16.gmra.mxu0 %v471
        %v648 = vpop.f32.mrf.mxu0
        %v649 = vadd.f32 %v397, %v648
        %v650 = vpop.f32.mrf.mxu0
        %v651 = vpop.f32.mrf.mxu0
        %v652 = vadd.f32 %v397, %v651
        %v653 = vpop.f32.mrf.mxu0
        %654 = vmatprep.mubr.bf16.mxu0 0
        %655 = vmatmul.mubr.bf16.gmra.mxu0 %v472
        %v656 = vpop.f32.mrf.mxu0
        %v657 = vadd.f32 %v397, %v656
        %v658 = vpop.f32.mrf.mxu0
        %v659 = vpop.f32.mrf.mxu0
        %v660 = vadd.f32 %v397, %v659
        %v661 = vpop.f32.mrf.mxu0
        %662 = vmatprep.mubr.bf16.mxu0 0
        %663 = vmatmul.mubr.bf16.gmra.mxu0 %v473
        %v664 = vpop.f32.mrf.mxu0
        %v665 = vadd.f32 %v397, %v664
        %v666 = vpop.f32.mrf.mxu0
        %v667 = vpop.f32.mrf.mxu0
        %v668 = vadd.f32 %v397, %v667
        %v669 = vpop.f32.mrf.mxu0
        %670 = vmatprep.mubr.bf16.mxu0 0
        %671 = vmatmul.mubr.bf16.gmra.mxu0 %v474
        %v672 = vpop.f32.mrf.mxu0
        %v673 = vadd.f32 %v397, %v672
        %v674 = vpop.f32.mrf.mxu0
        %v675 = vpop.f32.mrf.mxu0
        %v676 = vadd.f32 %v397, %v675
        %v677 = vpop.f32.mrf.mxu0
        %678 = vmatprep.mubr.bf16.mxu0 0
        %679 = vmatmul.mubr.bf16.gmra.mxu0 %v475
        %v680 = vpop.f32.mrf.mxu0
        %v681 = vadd.f32 %v397, %v680
        %v682 = vpop.f32.mrf.mxu0
        %v683 = vpop.f32.mrf.mxu0
        %v684 = vadd.f32 %v397, %v683
        %v685 = vpop.f32.mrf.mxu0
        %686 = vmatprep.mubr.bf16.mxu0 0
        %687 = vmatmul.mubr.bf16.gmra.mxu0 %v476
        %v688 = vpop.f32.mrf.mxu0
        %v689 = vadd.f32 %v397, %v688
        %v690 = vpop.f32.mrf.mxu0
        %v691 = vpop.f32.mrf.mxu0
        %v692 = vadd.f32 %v397, %v691
        %v693 = vpop.f32.mrf.mxu0
        %694 = vmatprep.mubr.bf16.mxu0 0
        %695 = vmatmul.mubr.bf16.gmra.mxu0 %v477
        %v696 = vpop.f32.mrf.mxu0
        %v697 = vadd.f32 %v397, %v696
        %v698 = vpop.f32.mrf.mxu0
        %v699 = vpop.f32.mrf.mxu0
        %v700 = vadd.f32 %v397, %v699
        %v701 = vpop.f32.mrf.mxu0
        %702 = vdwg.mxu0
        %v703 = vpack.c.bf16 %v580, %v577
        %v704 = vpack.c.bf16 %v588, %v585
        %v705 = vpack.c.bf16 %v596, %v593
        %v706 = vpack.c.bf16 %v604, %v601
        %v707 = vpack.c.bf16 %v612, %v609
        %v708 = vpack.c.bf16 %v620, %v617
        %v709 = vpack.c.bf16 %v628, %v625
        %v710 = vpack.c.bf16 %v636, %v633
        %v711 = vpack.c.bf16 %v644, %v641
        %v712 = vpack.c.bf16 %v652, %v649
        %v713 = vpack.c.bf16 %v660, %v657
        %v714 = vpack.c.bf16 %v668, %v665
        %v715 = vpack.c.bf16 %v676, %v673
        %v716 = vpack.c.bf16 %v684, %v681
        %v717 = vpack.c.bf16 %v692, %v689
        %v718 = vpack.c.bf16 %v700, %v697
        %v719 = vld [vmem:[#allocation7] sm:$0xf]
        %v720 = vld [vmem:[#allocation7 + $0x4] sm:$0xf]
        %v721 = vld [vmem:[#allocation7 + $0x8] sm:$0xf]
        %v722 = vld [vmem:[#allocation7 + $0xc] sm:$0xf]
        %v723 = vld [vmem:[#allocation7 + $0x10] sm:$0xf]
        %v724 = vld [vmem:[#allocation7 + $0x14] sm:$0xf]
        %v725 = vld [vmem:[#allocation7 + $0x18] sm:$0xf]
        %v726 = vld [vmem:[#allocation7 + $0x1c] sm:$0xf]
        %v727 = vld [vmem:[#allocation7 + $0x20] sm:$0xf]
        %v728 = vld [vmem:[#allocation7 + $0x24] sm:$0xf]
        %v729 = vld [vmem:[#allocation7 + $0x28] sm:$0xf]
        %v730 = vld [vmem:[#allocation7 + $0x2c] sm:$0xf]
        %v731 = vld [vmem:[#allocation7 + $0x30] sm:$0xf]
        %v732 = vld [vmem:[#allocation7 + $0x34] sm:$0xf]
        %v733 = vld [vmem:[#allocation7 + $0x38] sm:$0xf]
        %v734 = vld [vmem:[#allocation7 + $0x3c] sm:$0xf]
        %v735 = vld [vmem:[%s4] sm:$0x1]
        %v736 = vunpack.c.l.bf16 %v735
        %v737 = vlaneseq
        %v738 = vshrl.u32 %v737, 7
        %v739 = vsub.s32 0, %v738
        %v740 = vrot.slane %v736, %v739
        %v757 = vunpack.c.l.b16 %v719
        %v758 = vunpack.c.l.b16 %v720
        %v759 = vunpack.c.l.b16 %v721
        %v760 = vunpack.c.l.b16 %v722
        %v761 = vunpack.c.l.b16 %v723
        %v762 = vunpack.c.l.b16 %v724
        %v763 = vunpack.c.l.b16 %v725
        %v764 = vunpack.c.l.b16 %v726
        %v765 = vunpack.c.l.b16 %v727
        %v766 = vunpack.c.l.b16 %v728
        %v767 = vunpack.c.l.b16 %v729
        %v768 = vunpack.c.l.b16 %v730
        %v769 = vunpack.c.l.b16 %v731
        %v770 = vunpack.c.l.b16 %v732
        %v771 = vunpack.c.l.b16 %v733
        %v772 = vunpack.c.l.b16 %v734
        %v773 = vpack.c.b16 %v758, %v757
        %v774 = vpack.c.b16 %v760, %v759
        %v775 = vpack.c.b16 %v762, %v761
        %v776 = vpack.c.b16 %v764, %v763
        %v777 = vpack.c.b16 %v766, %v765
        %v778 = vpack.c.b16 %v768, %v767
        %v779 = vpack.c.b16 %v770, %v769
        %v780 = vpack.c.b16 %v772, %v771
        %789 = vmatprep.subr.bf16.mxu0 0
        %790 = vmatpush1.bf16.msra.mxu0 %v780
        %791 = vmatprep.subr.bf16.mxu0 0
        %792 = vmatpush1.bf16.msra.mxu0 %v779
        %793 = vmatprep.subr.bf16.mxu0 0
        %794 = vmatpush1.bf16.msra.mxu0 %v778
        %795 = vmatprep.subr.bf16.mxu0 0
        %796 = vmatpush1.bf16.msra.mxu0 %v777
        %797 = vmatprep.subr.bf16.mxu0 0
        %798 = vmatpush1.bf16.msra.mxu0 %v776
        %799 = vmatprep.subr.bf16.mxu0 0
        %800 = vmatpush1.bf16.msra.mxu0 %v775
        %801 = vmatprep.subr.bf16.mxu0 0
        %802 = vmatpush1.bf16.msra.mxu0 %v774
        %803 = vmatprep.subr.bf16.mxu0 0
        %804 = vmatpush1.bf16.msra.mxu0 %v773
        %805 = vmatprep.subr.bf16.mxu0 0
        %806 = vmatpush2.bf16.msra.mxu0 0
        %807 = vmatprep.subr.bf16.mxu0 0
        %808 = vmatpush2.bf16.msra.mxu0 0
        %809 = vmatprep.subr.bf16.mxu0 0
        %810 = vmatpush2.bf16.msra.mxu0 0
        %811 = vmatprep.subr.bf16.mxu0 0
        %812 = vmatpush2.bf16.msra.mxu0 0
        %813 = vmatprep.subr.bf16.mxu0 0
        %814 = vmatpush2.bf16.msra.mxu0 0
        %815 = vmatprep.subr.bf16.mxu0 0
        %816 = vmatpush2.bf16.msra.mxu0 0
        %817 = vmatprep.subr.bf16.mxu0 0
        %818 = vmatpush2.bf16.msra.mxu0 0
        %819 = vmatprep.subr.bf16.mxu0 0
        %820 = vmatpush2.bf16.msra.mxu0 0
        %821 = vmatprep.mubr.bf16.mxu0 0
        %822 = vmatmul.mubr.bf16.gmra.mxu0 %v703
        %v823 = vpop.f32.mrf.mxu0
        %v824 = vadd.f32 %v740, %v823
        %v825 = vpop.f32.mrf.mxu0
        %v826 = vpop.f32.mrf.mxu0
        %v827 = vadd.f32 %v740, %v826
        %v828 = vpop.f32.mrf.mxu0
        %829 = vmatprep.mubr.bf16.mxu0 0
        %830 = vmatmul.mubr.bf16.gmra.mxu0 %v704
        %v831 = vpop.f32.mrf.mxu0
        %v832 = vadd.f32 %v740, %v831
        %v833 = vpop.f32.mrf.mxu0
        %v834 = vpop.f32.mrf.mxu0
        %v835 = vadd.f32 %v740, %v834
        %v836 = vpop.f32.mrf.mxu0
        %837 = vmatprep.mubr.bf16.mxu0 0
        %838 = vmatmul.mubr.bf16.gmra.mxu0 %v705
        %v839 = vpop.f32.mrf.mxu0
        %v840 = vadd.f32 %v740, %v839
        %v841 = vpop.f32.mrf.mxu0
        %v842 = vpop.f32.mrf.mxu0
        %v843 = vadd.f32 %v740, %v842
        %v844 = vpop.f32.mrf.mxu0
        %845 = vmatprep.mubr.bf16.mxu0 0
        %846 = vmatmul.mubr.bf16.gmra.mxu0 %v706
        %v847 = vpop.f32.mrf.mxu0
        %v848 = vadd.f32 %v740, %v847
        %v849 = vpop.f32.mrf.mxu0
        %v850 = vpop.f32.mrf.mxu0
        %v851 = vadd.f32 %v740, %v850
        %v852 = vpop.f32.mrf.mxu0
        %853 = vmatprep.mubr.bf16.mxu0 0
        %854 = vmatmul.mubr.bf16.gmra.mxu0 %v707
        %v855 = vpop.f32.mrf.mxu0
        %v856 = vadd.f32 %v740, %v855
        %v857 = vpop.f32.mrf.mxu0
        %v858 = vpop.f32.mrf.mxu0
        %v859 = vadd.f32 %v740, %v858
        %v860 = vpop.f32.mrf.mxu0
        %861 = vmatprep.mubr.bf16.mxu0 0
        %862 = vmatmul.mubr.bf16.gmra.mxu0 %v708
        %v863 = vpop.f32.mrf.mxu0
        %v864 = vadd.f32 %v740, %v863
        %v865 = vpop.f32.mrf.mxu0
        %v866 = vpop.f32.mrf.mxu0
        %v867 = vadd.f32 %v740, %v866
        %v868 = vpop.f32.mrf.mxu0
        %869 = vmatprep.mubr.bf16.mxu0 0
        %870 = vmatmul.mubr.bf16.gmra.mxu0 %v709
        %v871 = vpop.f32.mrf.mxu0
        %v872 = vadd.f32 %v740, %v871
        %v873 = vpop.f32.mrf.mxu0
        %v874 = vpop.f32.mrf.mxu0
        %v875 = vadd.f32 %v740, %v874
        %v876 = vpop.f32.mrf.mxu0
        %877 = vmatprep.mubr.bf16.mxu0 0
        %878 = vmatmul.mubr.bf16.gmra.mxu0 %v710
        %v879 = vpop.f32.mrf.mxu0
        %v880 = vadd.f32 %v740, %v879
        %v881 = vpop.f32.mrf.mxu0
        %v882 = vpop.f32.mrf.mxu0
        %v883 = vadd.f32 %v740, %v882
        %v884 = vpop.f32.mrf.mxu0
        %885 = vmatprep.mubr.bf16.mxu0 0
        %886 = vmatmul.mubr.bf16.gmra.mxu0 %v711
        %v887 = vpop.f32.mrf.mxu0
        %v888 = vadd.f32 %v740, %v887
        %v889 = vpop.f32.mrf.mxu0
        %v890 = vpop.f32.mrf.mxu0
        %v891 = vadd.f32 %v740, %v890
        %v892 = vpop.f32.mrf.mxu0
        %893 = vmatprep.mubr.bf16.mxu0 0
        %894 = vmatmul.mubr.bf16.gmra.mxu0 %v712
        %v895 = vpop.f32.mrf.mxu0
        %v896 = vadd.f32 %v740, %v895
        %v897 = vpop.f32.mrf.mxu0
        %v898 = vpop.f32.mrf.mxu0
        %v899 = vadd.f32 %v740, %v898
        %v900 = vpop.f32.mrf.mxu0
        %901 = vmatprep.mubr.bf16.mxu0 0
        %902 = vmatmul.mubr.bf16.gmra.mxu0 %v713
        %v903 = vpop.f32.mrf.mxu0
        %v904 = vadd.f32 %v740, %v903
        %v905 = vpop.f32.mrf.mxu0
        %v906 = vpop.f32.mrf.mxu0
        %v907 = vadd.f32 %v740, %v906
        %v908 = vpop.f32.mrf.mxu0
        %909 = vmatprep.mubr.bf16.mxu0 0
        %910 = vmatmul.mubr.bf16.gmra.mxu0 %v714
        %v911 = vpop.f32.mrf.mxu0
        %v912 = vadd.f32 %v740, %v911
        %v913 = vpop.f32.mrf.mxu0
        %v914 = vpop.f32.mrf.mxu0
        %v915 = vadd.f32 %v740, %v914
        %v916 = vpop.f32.mrf.mxu0
        %917 = vmatprep.mubr.bf16.mxu0 0
        %918 = vmatmul.mubr.bf16.gmra.mxu0 %v715
        %v919 = vpop.f32.mrf.mxu0
        %v920 = vadd.f32 %v740, %v919
        %v921 = vpop.f32.mrf.mxu0
        %v922 = vpop.f32.mrf.mxu0
        %v923 = vadd.f32 %v740, %v922
        %v924 = vpop.f32.mrf.mxu0
        %925 = vmatprep.mubr.bf16.mxu0 0
        %926 = vmatmul.mubr.bf16.gmra.mxu0 %v716
        %v927 = vpop.f32.mrf.mxu0
        %v928 = vadd.f32 %v740, %v927
        %v929 = vpop.f32.mrf.mxu0
        %v930 = vpop.f32.mrf.mxu0
        %v931 = vadd.f32 %v740, %v930
        %v932 = vpop.f32.mrf.mxu0
        %933 = vmatprep.mubr.bf16.mxu0 0
        %934 = vmatmul.mubr.bf16.gmra.mxu0 %v717
        %v935 = vpop.f32.mrf.mxu0
        %v936 = vadd.f32 %v740, %v935
        %v937 = vpop.f32.mrf.mxu0
        %v938 = vpop.f32.mrf.mxu0
        %v939 = vadd.f32 %v740, %v938
        %v940 = vpop.f32.mrf.mxu0
        %941 = vmatprep.mubr.bf16.mxu0 0
        %942 = vmatmul.mubr.bf16.gmra.mxu0 %v718
        %v943 = vpop.f32.mrf.mxu0
        %v944 = vadd.f32 %v740, %v943
        %v945 = vpop.f32.mrf.mxu0
        %v946 = vpop.f32.mrf.mxu0
        %v947 = vadd.f32 %v740, %v946
        %v948 = vpop.f32.mrf.mxu0
        %949 = vdwg.mxu0
        %v950 = vpack.c.bf16 %v827, %v824
        %v951 = vpack.c.bf16 %v835, %v832
        %v952 = vpack.c.bf16 %v843, %v840
        %v953 = vpack.c.bf16 %v851, %v848
        %v954 = vpack.c.bf16 %v859, %v856
        %v955 = vpack.c.bf16 %v867, %v864
        %v956 = vpack.c.bf16 %v875, %v872
        %v957 = vpack.c.bf16 %v883, %v880
        %v958 = vpack.c.bf16 %v891, %v888
        %v959 = vpack.c.bf16 %v899, %v896
        %v960 = vpack.c.bf16 %v907, %v904
        %v961 = vpack.c.bf16 %v915, %v912
        %v962 = vpack.c.bf16 %v923, %v920
        %v963 = vpack.c.bf16 %v931, %v928
        %v964 = vpack.c.bf16 %v939, %v936
        %v965 = vpack.c.bf16 %v947, %v944
        %v966 = vld [vmem:[#allocation8] sm:$0xf]
        %v967 = vld [vmem:[#allocation8 + $0x4] sm:$0xf]
        %v968 = vld [vmem:[#allocation8 + $0x8] sm:$0xf]
        %v969 = vld [vmem:[#allocation8 + $0xc] sm:$0xf]
        %v970 = vld [vmem:[#allocation8 + $0x10] sm:$0xf]
        %v971 = vld [vmem:[#allocation8 + $0x14] sm:$0xf]
        %v972 = vld [vmem:[#allocation8 + $0x18] sm:$0xf]
        %v973 = vld [vmem:[#allocation8 + $0x1c] sm:$0xf]
        %v974 = vld [vmem:[#allocation8 + $0x20] sm:$0xf]
        %v975 = vld [vmem:[#allocation8 + $0x24] sm:$0xf]
        %v976 = vld [vmem:[#allocation8 + $0x28] sm:$0xf]
        %v977 = vld [vmem:[#allocation8 + $0x2c] sm:$0xf]
        %v978 = vld [vmem:[#allocation8 + $0x30] sm:$0xf]
        %v979 = vld [vmem:[#allocation8 + $0x34] sm:$0xf]
        %v980 = vld [vmem:[#allocation8 + $0x38] sm:$0xf]
        %v981 = vld [vmem:[#allocation8 + $0x3c] sm:$0xf]
        %v982 = vld [vmem:[%s6] sm:$0x1]
        %v983 = vunpack.c.l.bf16 %v982
        %v984 = vlaneseq
        %v985 = vshrl.u32 %v984, 7
        %v986 = vsub.s32 0, %v985
        %v987 = vrot.slane %v983, %v986
        %v1004 = vunpack.c.l.b16 %v966
        %v1005 = vunpack.c.l.b16 %v967
        %v1006 = vunpack.c.l.b16 %v968
        %v1007 = vunpack.c.l.b16 %v969
        %v1008 = vunpack.c.l.b16 %v970
        %v1009 = vunpack.c.l.b16 %v971
        %v1010 = vunpack.c.l.b16 %v972
        %v1011 = vunpack.c.l.b16 %v973
        %v1012 = vunpack.c.l.b16 %v974
        %v1013 = vunpack.c.l.b16 %v975
        %v1014 = vunpack.c.l.b16 %v976
        %v1015 = vunpack.c.l.b16 %v977
        %v1016 = vunpack.c.l.b16 %v978
        %v1017 = vunpack.c.l.b16 %v979
        %v1018 = vunpack.c.l.b16 %v980
        %v1019 = vunpack.c.l.b16 %v981
        %v1020 = vpack.c.b16 %v1005, %v1004
        %v1021 = vpack.c.b16 %v1007, %v1006
        %v1022 = vpack.c.b16 %v1009, %v1008
        %v1023 = vpack.c.b16 %v1011, %v1010
        %v1024 = vpack.c.b16 %v1013, %v1012
        %v1025 = vpack.c.b16 %v1015, %v1014
        %v1026 = vpack.c.b16 %v1017, %v1016
        %v1027 = vpack.c.b16 %v1019, %v1018
        %1036 = vmatprep.subr.bf16.mxu0 0
        %1037 = vmatpush1.bf16.msra.mxu0 %v1027
        %1038 = vmatprep.subr.bf16.mxu0 0
        %1039 = vmatpush1.bf16.msra.mxu0 %v1026
        %1040 = vmatprep.subr.bf16.mxu0 0
        %1041 = vmatpush1.bf16.msra.mxu0 %v1025
        %1042 = vmatprep.subr.bf16.mxu0 0
        %1043 = vmatpush1.bf16.msra.mxu0 %v1024
        %1044 = vmatprep.subr.bf16.mxu0 0
        %1045 = vmatpush1.bf16.msra.mxu0 %v1023
        %1046 = vmatprep.subr.bf16.mxu0 0
        %1047 = vmatpush1.bf16.msra.mxu0 %v1022
        %1048 = vmatprep.subr.bf16.mxu0 0
        %1049 = vmatpush1.bf16.msra.mxu0 %v1021
        %1050 = vmatprep.subr.bf16.mxu0 0
        %1051 = vmatpush1.bf16.msra.mxu0 %v1020
        %1052 = vmatprep.subr.bf16.mxu0 0
        %1053 = vmatpush2.bf16.msra.mxu0 0
        %1054 = vmatprep.subr.bf16.mxu0 0
        %1055 = vmatpush2.bf16.msra.mxu0 0
        %1056 = vmatprep.subr.bf16.mxu0 0
        %1057 = vmatpush2.bf16.msra.mxu0 0
        %1058 = vmatprep.subr.bf16.mxu0 0
        %1059 = vmatpush2.bf16.msra.mxu0 0
        %1060 = vmatprep.subr.bf16.mxu0 0
        %1061 = vmatpush2.bf16.msra.mxu0 0
        %1062 = vmatprep.subr.bf16.mxu0 0
        %1063 = vmatpush2.bf16.msra.mxu0 0
        %1064 = vmatprep.subr.bf16.mxu0 0
        %1065 = vmatpush2.bf16.msra.mxu0 0
        %1066 = vmatprep.subr.bf16.mxu0 0
        %1067 = vmatpush2.bf16.msra.mxu0 0
        %1068 = vmatprep.mubr.bf16.mxu0 0
        %1069 = vmatmul.mubr.bf16.gmra.mxu0 %v950
        %v1070 = vpop.f32.mrf.mxu0
        %v1071 = vadd.f32 %v987, %v1070
        %v1072 = vpop.f32.mrf.mxu0
        %v1073 = vpop.f32.mrf.mxu0
        %v1074 = vadd.f32 %v987, %v1073
        %v1075 = vpop.f32.mrf.mxu0
        %1076 = vmatprep.mubr.bf16.mxu0 0
        %1077 = vmatmul.mubr.bf16.gmra.mxu0 %v951
        %v1078 = vpop.f32.mrf.mxu0
        %v1079 = vadd.f32 %v987, %v1078
        %v1080 = vpop.f32.mrf.mxu0
        %v1081 = vpop.f32.mrf.mxu0
        %v1082 = vadd.f32 %v987, %v1081
        %v1083 = vpop.f32.mrf.mxu0
        %1084 = vmatprep.mubr.bf16.mxu0 0
        %1085 = vmatmul.mubr.bf16.gmra.mxu0 %v952
        %v1086 = vpop.f32.mrf.mxu0
        %v1087 = vadd.f32 %v987, %v1086
        %v1088 = vpop.f32.mrf.mxu0
        %v1089 = vpop.f32.mrf.mxu0
        %v1090 = vadd.f32 %v987, %v1089
        %v1091 = vpop.f32.mrf.mxu0
        %1092 = vmatprep.mubr.bf16.mxu0 0
        %1093 = vmatmul.mubr.bf16.gmra.mxu0 %v953
        %v1094 = vpop.f32.mrf.mxu0
        %v1095 = vadd.f32 %v987, %v1094
        %v1096 = vpop.f32.mrf.mxu0
        %v1097 = vpop.f32.mrf.mxu0
        %v1098 = vadd.f32 %v987, %v1097
        %v1099 = vpop.f32.mrf.mxu0
        %1100 = vmatprep.mubr.bf16.mxu0 0
        %1101 = vmatmul.mubr.bf16.gmra.mxu0 %v954
        %v1102 = vpop.f32.mrf.mxu0
        %v1103 = vadd.f32 %v987, %v1102
        %v1104 = vpop.f32.mrf.mxu0
        %v1105 = vpop.f32.mrf.mxu0
        %v1106 = vadd.f32 %v987, %v1105
        %v1107 = vpop.f32.mrf.mxu0
        %1108 = vmatprep.mubr.bf16.mxu0 0
        %1109 = vmatmul.mubr.bf16.gmra.mxu0 %v955
        %v1110 = vpop.f32.mrf.mxu0
        %v1111 = vadd.f32 %v987, %v1110
        %v1112 = vpop.f32.mrf.mxu0
        %v1113 = vpop.f32.mrf.mxu0
        %v1114 = vadd.f32 %v987, %v1113
        %v1115 = vpop.f32.mrf.mxu0
        %1116 = vmatprep.mubr.bf16.mxu0 0
        %1117 = vmatmul.mubr.bf16.gmra.mxu0 %v956
        %v1118 = vpop.f32.mrf.mxu0
        %v1119 = vadd.f32 %v987, %v1118
        %v1120 = vpop.f32.mrf.mxu0
        %v1121 = vpop.f32.mrf.mxu0
        %v1122 = vadd.f32 %v987, %v1121
        %v1123 = vpop.f32.mrf.mxu0
        %1124 = vmatprep.mubr.bf16.mxu0 0
        %1125 = vmatmul.mubr.bf16.gmra.mxu0 %v957
        %v1126 = vpop.f32.mrf.mxu0
        %v1127 = vadd.f32 %v987, %v1126
        %v1128 = vpop.f32.mrf.mxu0
        %v1129 = vpop.f32.mrf.mxu0
        %v1130 = vadd.f32 %v987, %v1129
        %v1131 = vpop.f32.mrf.mxu0
        %1132 = vmatprep.mubr.bf16.mxu0 0
        %1133 = vmatmul.mubr.bf16.gmra.mxu0 %v958
        %v1134 = vpop.f32.mrf.mxu0
        %v1135 = vadd.f32 %v987, %v1134
        %v1136 = vpop.f32.mrf.mxu0
        %v1137 = vpop.f32.mrf.mxu0
        %v1138 = vadd.f32 %v987, %v1137
        %v1139 = vpop.f32.mrf.mxu0
        %1140 = vmatprep.mubr.bf16.mxu0 0
        %1141 = vmatmul.mubr.bf16.gmra.mxu0 %v959
        %v1142 = vpop.f32.mrf.mxu0
        %v1143 = vadd.f32 %v987, %v1142
        %v1144 = vpop.f32.mrf.mxu0
        %v1145 = vpop.f32.mrf.mxu0
        %v1146 = vadd.f32 %v987, %v1145
        %v1147 = vpop.f32.mrf.mxu0
        %1148 = vmatprep.mubr.bf16.mxu0 0
        %1149 = vmatmul.mubr.bf16.gmra.mxu0 %v960
        %v1150 = vpop.f32.mrf.mxu0
        %v1151 = vadd.f32 %v987, %v1150
        %v1152 = vpop.f32.mrf.mxu0
        %v1153 = vpop.f32.mrf.mxu0
        %v1154 = vadd.f32 %v987, %v1153
        %v1155 = vpop.f32.mrf.mxu0
        %1156 = vmatprep.mubr.bf16.mxu0 0
        %1157 = vmatmul.mubr.bf16.gmra.mxu0 %v961
        %v1158 = vpop.f32.mrf.mxu0
        %v1159 = vadd.f32 %v987, %v1158
        %v1160 = vpop.f32.mrf.mxu0
        %v1161 = vpop.f32.mrf.mxu0
        %v1162 = vadd.f32 %v987, %v1161
        %v1163 = vpop.f32.mrf.mxu0
        %1164 = vmatprep.mubr.bf16.mxu0 0
        %1165 = vmatmul.mubr.bf16.gmra.mxu0 %v962
        %v1166 = vpop.f32.mrf.mxu0
        %v1167 = vadd.f32 %v987, %v1166
        %v1168 = vpop.f32.mrf.mxu0
        %v1169 = vpop.f32.mrf.mxu0
        %v1170 = vadd.f32 %v987, %v1169
        %v1171 = vpop.f32.mrf.mxu0
        %1172 = vmatprep.mubr.bf16.mxu0 0
        %1173 = vmatmul.mubr.bf16.gmra.mxu0 %v963
        %v1174 = vpop.f32.mrf.mxu0
        %v1175 = vadd.f32 %v987, %v1174
        %v1176 = vpop.f32.mrf.mxu0
        %v1177 = vpop.f32.mrf.mxu0
        %v1178 = vadd.f32 %v987, %v1177
        %v1179 = vpop.f32.mrf.mxu0
        %1180 = vmatprep.mubr.bf16.mxu0 0
        %1181 = vmatmul.mubr.bf16.gmra.mxu0 %v964
        %v1182 = vpop.f32.mrf.mxu0
        %v1183 = vadd.f32 %v987, %v1182
        %v1184 = vpop.f32.mrf.mxu0
        %v1185 = vpop.f32.mrf.mxu0
        %v1186 = vadd.f32 %v987, %v1185
        %v1187 = vpop.f32.mrf.mxu0
        %1188 = vmatprep.mubr.bf16.mxu0 0
        %1189 = vmatmul.mubr.bf16.gmra.mxu0 %v965
        %v1190 = vpop.f32.mrf.mxu0
        %v1191 = vadd.f32 %v987, %v1190
        %v1192 = vpop.f32.mrf.mxu0
        %v1193 = vpop.f32.mrf.mxu0
        %v1194 = vadd.f32 %v987, %v1193
        %v1195 = vpop.f32.mrf.mxu0
        %1196 = vdwg.mxu0
        %v1197 = vpack.c.bf16 %v1074, %v1071
        %v1198 = vpack.c.bf16 %v1082, %v1079
        %v1199 = vpack.c.bf16 %v1090, %v1087
        %v1200 = vpack.c.bf16 %v1098, %v1095
        %v1201 = vpack.c.bf16 %v1106, %v1103
        %v1202 = vpack.c.bf16 %v1114, %v1111
        %v1203 = vpack.c.bf16 %v1122, %v1119
        %v1204 = vpack.c.bf16 %v1130, %v1127
        %v1205 = vpack.c.bf16 %v1138, %v1135
        %v1206 = vpack.c.bf16 %v1146, %v1143
        %v1207 = vpack.c.bf16 %v1154, %v1151
        %v1208 = vpack.c.bf16 %v1162, %v1159
        %v1209 = vpack.c.bf16 %v1170, %v1167
        %v1210 = vpack.c.bf16 %v1178, %v1175
        %v1211 = vpack.c.bf16 %v1186, %v1183
        %v1212 = vpack.c.bf16 %v1194, %v1191
        %v1229 = vunpack.c.l.b16 %v1197
        %v1230 = vunpack.c.h.b16 %v1197
        %v1231 = vunpack.c.l.b16 %v1198
        %v1232 = vunpack.c.h.b16 %v1198
        %v1233 = vunpack.c.l.b16 %v1199
        %v1234 = vunpack.c.h.b16 %v1199
        %v1235 = vunpack.c.l.b16 %v1200
        %v1236 = vunpack.c.h.b16 %v1200
        %v1237 = vunpack.c.l.b16 %v1201
        %v1238 = vunpack.c.h.b16 %v1201
        %v1239 = vunpack.c.l.b16 %v1202
        %v1240 = vunpack.c.h.b16 %v1202
        %v1241 = vunpack.c.l.b16 %v1203
        %v1242 = vunpack.c.h.b16 %v1203
        %v1243 = vunpack.c.l.b16 %v1204
        %v1244 = vunpack.c.h.b16 %v1204
        %v1245 = vunpack.c.l.b16 %v1205
        %v1246 = vunpack.c.h.b16 %v1205
        %v1247 = vunpack.c.l.b16 %v1206
        %v1248 = vunpack.c.h.b16 %v1206
        %v1249 = vunpack.c.l.b16 %v1207
        %v1250 = vunpack.c.h.b16 %v1207
        %v1251 = vunpack.c.l.b16 %v1208
        %v1252 = vunpack.c.h.b16 %v1208
        %v1253 = vunpack.c.l.b16 %v1209
        %v1254 = vunpack.c.h.b16 %v1209
        %v1255 = vunpack.c.l.b16 %v1210
        %v1256 = vunpack.c.h.b16 %v1210
        %v1257 = vunpack.c.l.b16 %v1211
        %v1258 = vunpack.c.h.b16 %v1211
        %v1259 = vunpack.c.l.b16 %v1212
        %v1260 = vunpack.c.h.b16 %v1212
        %v1261 = vpack.c.b16 %v1229, %v1229
        %v1262 = vpack.c.b16 %v1230, %v1230
        %v1263 = vpack.c.b16 %v1231, %v1231
        %v1264 = vpack.c.b16 %v1232, %v1232
        %v1265 = vpack.c.b16 %v1233, %v1233
        %v1266 = vpack.c.b16 %v1234, %v1234
        %v1267 = vpack.c.b16 %v1235, %v1235
        %v1268 = vpack.c.b16 %v1236, %v1236
        %v1269 = vpack.c.b16 %v1237, %v1237
        %v1270 = vpack.c.b16 %v1238, %v1238
        %v1271 = vpack.c.b16 %v1239, %v1239
        %v1272 = vpack.c.b16 %v1240, %v1240
        %v1273 = vpack.c.b16 %v1241, %v1241
        %v1274 = vpack.c.b16 %v1242, %v1242
        %v1275 = vpack.c.b16 %v1243, %v1243
        %v1276 = vpack.c.b16 %v1244, %v1244
        %v1277 = vpack.c.b16 %v1245, %v1245
        %v1278 = vpack.c.b16 %v1246, %v1246
        %v1279 = vpack.c.b16 %v1247, %v1247
        %v1280 = vpack.c.b16 %v1248, %v1248
        %v1281 = vpack.c.b16 %v1249, %v1249
        %v1282 = vpack.c.b16 %v1250, %v1250
        %v1283 = vpack.c.b16 %v1251, %v1251
        %v1284 = vpack.c.b16 %v1252, %v1252
        %v1285 = vpack.c.b16 %v1253, %v1253
        %v1286 = vpack.c.b16 %v1254, %v1254
        %v1287 = vpack.c.b16 %v1255, %v1255
        %v1288 = vpack.c.b16 %v1256, %v1256
        %v1289 = vpack.c.b16 %v1257, %v1257
        %v1290 = vpack.c.b16 %v1258, %v1258
        %v1291 = vpack.c.b16 %v1259, %v1259
        %v1292 = vpack.c.b16 %v1260, %v1260
        %1325 = vst [vmem:[%s340] sm:$0xf] %v1261
        %1326 = vst [vmem:[%s340 + $0x4] sm:$0xf] %v1262
        %1327 = vst [vmem:[%s340 + $0x8] sm:$0xf] %v1263
        %1328 = vst [vmem:[%s340 + $0xc] sm:$0xf] %v1264
        %1329 = vst [vmem:[%s340 + $0x10] sm:$0xf] %v1265
        %1330 = vst [vmem:[%s340 + $0x14] sm:$0xf] %v1266
        %1331 = vst [vmem:[%s340 + $0x18] sm:$0xf] %v1267
        %1332 = vst [vmem:[%s340 + $0x1c] sm:$0xf] %v1268
        %1333 = vst [vmem:[%s340 + $0x20] sm:$0xf] %v1269
        %1334 = vst [vmem:[%s340 + $0x24] sm:$0xf] %v1270
        %1335 = vst [vmem:[%s340 + $0x28] sm:$0xf] %v1271
        %1336 = vst [vmem:[%s340 + $0x2c] sm:$0xf] %v1272
        %1337 = vst [vmem:[%s340 + $0x30] sm:$0xf] %v1273
        %1338 = vst [vmem:[%s340 + $0x34] sm:$0xf] %v1274
        %1339 = vst [vmem:[%s340 + $0x38] sm:$0xf] %v1275
        %1340 = vst [vmem:[%s340 + $0x3c] sm:$0xf] %v1276
        %1341 = vst [vmem:[%s340 + $0x40] sm:$0xf] %v1277
        %1342 = vst [vmem:[%s340 + $0x44] sm:$0xf] %v1278
        %1343 = vst [vmem:[%s340 + $0x48] sm:$0xf] %v1279
        %1344 = vst [vmem:[%s340 + $0x4c] sm:$0xf] %v1280
        %1345 = vst [vmem:[%s340 + $0x50] sm:$0xf] %v1281
        %1346 = vst [vmem:[%s340 + $0x54] sm:$0xf] %v1282
        %1347 = vst [vmem:[%s340 + $0x58] sm:$0xf] %v1283
        %1348 = vst [vmem:[%s340 + $0x5c] sm:$0xf] %v1284
        %1349 = vst [vmem:[%s340 + $0x60] sm:$0xf] %v1285
        %1350 = vst [vmem:[%s340 + $0x64] sm:$0xf] %v1286
        %1351 = vst [vmem:[%s340 + $0x68] sm:$0xf] %v1287
        %1352 = vst [vmem:[%s340 + $0x6c] sm:$0xf] %v1288
        %1353 = vst [vmem:[%s340 + $0x70] sm:$0xf] %v1289
        %1354 = vst [vmem:[%s340 + $0x74] sm:$0xf] %v1290
        %1355 = vst [vmem:[%s340 + $0x78] sm:$0xf] %v1291
        %1356 = vst [vmem:[%s340 + $0x7c] sm:$0xf] %v1292
        %s1357 = sand.u32 %s186, 1
        %s1358 = scalar_lea.sflag [#allocation4], %s1357
        %s1359 = sand.u32 %s186, 1
        %s1360 = smul.addr %s1359, 128
        %s1361 = scalar_lea.vmem [#allocation10], %s1360
        // Predicated region
        $region65: #{tpu_custom_call.1} parent=47 // pred_check
          %p1362 = pneg %p196
        $region66: #{tpu_custom_call.1} parent=47 // pred_check_branch
          %1364 = sbr.rel (%p1362) target = $region68
        $region67: #{tpu_custom_call.1} parent=47 // pred_region
          %s1365 = smul.u32 32, %s26
          %s1367 = ssub.s32 2048, 2048
          %1368 = vsyncadd %s1358, %s1367
          %s1369 = smul.addr %s1365, 64
          %s1370 = scalar_lea.hbm %s7, %s1369
          %s1371 = sshll.u32 %s1361, 4
          %s1372 = int_to_ptr.vmem [resolvable:$true] %s1371
          %1377 = dma.vmem_to_hbm [thread:$0]  %s1372, 2048, %s1370, %s1358, 64, 64, 4
        $region68: #{tpu_custom_call.1} parent=47 // pred_fallthru
          _
      $region48: #{tpu_custom_call.1} parent=5 // pred_fallthru
        _
      %p1378 = scmp.le.s32.totalorder 2, %s21
      // Predicated region
      $region69: #{tpu_custom_call.1} parent=5 // pred_check
        %p1379 = pneg %p1378
      $region70: #{tpu_custom_call.1} parent=5 // pred_check_branch
        %1381 = sbr.rel (%p1379) target = $region72
      $region71: #{tpu_custom_call.1} parent=5 // pred_region
        %s1382 = ssub.s32 %s21, 2
        // Predicated region
        $region73: #{tpu_custom_call.1} parent=71 // pred_check
          %p1383 = pneg %p202
        $region74: #{tpu_custom_call.1} parent=71 // pred_check_branch
          %1385 = sbr.rel (%p1383) target = $region76
        $region75: #{tpu_custom_call.1} parent=71 // pred_region
          %s1386 = sand.u32 %s187, 1
          %s1387 = scalar_lea.sflag [#allocation4], %s1386
          %s1388 = sand.u32 %s187, 1
          %s1389 = smul.addr %s1388, 128
          %s1390 = scalar_lea.vmem [#allocation10], %s1389
          %1391 = dma.done %s1387, 2048
        $region76: #{tpu_custom_call.1} parent=71 // pred_fallthru
          _
      $region72: #{tpu_custom_call.1} parent=5 // pred_fallthru
        _
    $region6: #{tpu_custom_call.1} parent=1 // loop_footer
      %s25 = sadd.s32 1, %s21
    $region7: #{tpu_custom_call.1} parent=1 // loop_footer_branch
      %20 = sbr.rel target = $region3
    $region8: #{tpu_custom_call.1} parent=1 // loop_exit
      _
    %1392 = vsyncpa [#allocation3], 1
    %s1393 = scalar_lea.sflag [#allocation3], 1
    %1394 = vsyncpa %s1393, 1
    %1395 = vsyncpa [#allocation6], 1
    %1396 = vsyncpa [#allocation9], 1
    %1397 = vsyncpa [#allocation4], 1
    %s1398 = scalar_lea.sflag [#allocation4], 1
    %1399 = vsyncpa %s1398, 1

// kernel: tpu_custom_call.1
$region0: #{tpu_custom_call.1}
  #allocation0 [shape = 'u32[]', space=smem, size = 0x4, offset = 0x4, fixed_abs, tag = 'smem constant byte address 0x4 - core index']
  #allocation1 [shape = 'u32[144,128]{1,0:T(1,128)}', space=vmem, size = 0x12000, scoped, tag = 'internal scratch']
  %s0 = inlined_call_operand.hbm [shape: bf16[512,128], index: 0, kind: input, shape index: {}]
  %s1 = inlined_call_operand.hbm [shape: bf16[128,128], index: 1, kind: input, shape index: {}]
  %s2 = inlined_call_operand.vmem [shape: bf16[1,128], index: 2, kind: input, shape index: {}]
  %s3 = inlined_call_operand.hbm [shape: bf16[128,128], index: 3, kind: input, shape index: {}]
  %s4 = inlined_call_operand.vmem [shape: bf16[1,128], index: 4, kind: input, shape index: {}]
  %s5 = inlined_call_operand.hbm [shape: bf16[128,128], index: 5, kind: input, shape index: {}]
  %s6 = inlined_call_operand.vmem [shape: bf16[1,128], index: 6, kind: input, shape index: {}]
  %s7 = inlined_call_operand.hbm [shape: bf16[512,128], index: 7, kind: output, shape index: {}]
  %s8 = sld [smem:[#allocation0]]
  $region77: #{tpu_custom_call.1} parent=0
    _
  %s10 = ssub.s32 1, %s8
  %s11 = scalar_select 0, %s10, %s8
  $region1: #{tpu_custom_call.1} parent=0
    #allocation2 [shape = 'u8[131072]{0}', space=vmem, size = 0x20000, scoped, tag = 'input window, operand 0']
    #allocation3 [shape = 's32[2]{0}', space=sflag, size = 0x8, scoped, tag = 'scoped memory for tpu_custom_call.1']
    #allocation4 [shape = 's32[2]{0}', space=sflag, size = 0x8, scoped, tag = 'scoped memory for tpu_custom_call.1']
    #allocation5 [shape = 'u8[32768]{0}', space=vmem, size = 0x8000, scoped, tag = 'input window, operand 1, single buffered']
    #allocation6 [shape = 's32[1]{0}', space=sflag, size = 0x4, scoped, tag = 'scoped memory for tpu_custom_call.1']
    #allocation7 [shape = 'u8[32768]{0}', space=vmem, size = 0x8000, scoped, tag = 'input window, operand 3, single buffered']
    #allocation8 [shape = 'u8[32768]{0}', space=vmem, size = 0x8000, scoped, tag = 'input window, operand 5, single buffered']
    #allocation9 [shape = 's32[1]{0}', space=sflag, size = 0x4, scoped, tag = 'scoped memory for tpu_custom_call.1']
    #allocation10 [shape = 'u8[131072]{0}', space=vmem, size = 0x20000, scoped, tag = 'output window, operand 0']
    %12 = vsyncpa [#allocation3], 0
    %s13 = scalar_lea.sflag [#allocation3], 1
    %14 = vsyncpa %s13, 0
    %15 = vsyncpa [#allocation6], 0
    %16 = vsyncpa [#allocation9], 0
    %17 = vsyncpa [#allocation4], 0
    %s18 = scalar_lea.sflag [#allocation4], 1
    %19 = vsyncpa %s18, 0
    loop: start=0, step=1, limit=4
    $region2: #{tpu_custom_call.1} parent=1 // loop_pre_header
      _
    $region3: #{tpu_custom_call.1} parent=1 // loop_header
      %s21 = sphi 0, %s25
      %p22 = scmp.ge.s32.totalorder %s21, 4
      %s31 = sphi 0, %s33
      %s34 = sphi 0, %s31
      %s35 = sphi 0, %s34
      %s51 = sphi 0, %s35
      %s55 = sphi 0, %s55
      %s57 = sphi 0, %s55
      %s58 = sphi 0, %s57
      %s72 = sphi 0, %s58
      %s76 = sphi 0, %s76
      %s78 = sphi 0, %s76
      %s79 = sphi 0, %s78
      %s93 = sphi 0, %s79
      %s97 = sphi 0, %s97
      %s99 = sphi 0, %s97
      %s100 = sphi 0, %s99
      %s114 = sphi 0, %s100
      %s118 = sphi 0, %s118
      %s120 = sphi 0, %s118
      %s121 = sphi 0, %s120
      %s135 = sphi 0, %s121
      %s139 = sphi 0, %s139
      %s141 = sphi 0, %s139
      %s142 = sphi 0, %s141
      %s156 = sphi 0, %s142
      %s160 = sphi 0, %s160
      %s162 = sphi 0, %s160
      %s163 = sphi 0, %s162
      %s177 = sphi 0, %s163
      %s183 = sphi 0, %s185
      %s186 = sphi 0, %s183
      %s187 = sphi 0, %s186
      %s203 = sphi 0, %s187
    $region4: #{tpu_custom_call.1} parent=1 // loop_header_branch
      %24 = sbr.rel (%p22) target = $region8
    $region5: #{tpu_custom_call.1} parent=1 // loop_body
      %s26 = ssub.s32 %s21, 1
      %s27 = ssub.s32 %s21, 2
      %s28 = sadd.s32 %s21, 1
      %s29 = ssub.s32 %s21, %s28
      %p30 = scmp.eq.s32.totalorder %s29, 0
      %s32 = sadd.s32 %s31, 1
      %s33 = scalar_select %p30, %s31, %s32
      %p36 = pneg %p30
      %p37 = scmp.eq.s32.totalorder %s21, 1
      %p38 = por %p36, %p37
      %p39 = scmp.ne.s32.totalorder %s31, %s34
      %p40 = scmp.eq.s32.totalorder %s21, 0
      %p41 = por %p39, %p40
      %p42 = scmp.ne.s32.totalorder %s31, %s34
      %p43 = scmp.eq.s32.totalorder %s26, 1
      %p44 = por %p42, %p43
      %p45 = scmp.ne.s32.totalorder %s34, %s35
      %p46 = scmp.eq.s32.totalorder %s26, 0
      %p47 = por %p45, %p46
      %p48 = scmp.ne.s32.totalorder %s34, %s35
      %p49 = scmp.eq.s32.totalorder %s27, 1
      %p50 = por %p48, %p49
      %p52 = scmp.ne.s32.totalorder %s35, %s51
      %p53 = scmp.eq.s32.totalorder %s27, 0
      %p54 = por %p52, %p53
      %s56 = sadd.s32 %s55, 1
      %p59 = scmp.eq.s32.totalorder %s21, 1
      %p60 = scmp.ne.s32.totalorder %s55, %s57
      %p61 = scmp.eq.s32.totalorder %s21, 0
      %p62 = por %p60, %p61
      %p63 = scmp.ne.s32.totalorder %s55, %s57
      %p64 = scmp.eq.s32.totalorder %s26, 1
      %p65 = por %p63, %p64
      %p66 = scmp.ne.s32.totalorder %s57, %s58
      %p67 = scmp.eq.s32.totalorder %s26, 0
      %p68 = por %p66, %p67
      %p69 = scmp.ne.s32.totalorder %s57, %s58
      %p70 = scmp.eq.s32.totalorder %s27, 1
      %p71 = por %p69, %p70
      %p73 = scmp.ne.s32.totalorder %s58, %s72
      %p74 = scmp.eq.s32.totalorder %s27, 0
      %p75 = por %p73, %p74
      %s77 = sadd.s32 %s76, 1
      %p80 = scmp.eq.s32.totalorder %s21, 1
      %p81 = scmp.ne.s32.totalorder %s76, %s78
      %p82 = scmp.eq.s32.totalorder %s21, 0
      %p83 = por %p81, %p82
      %p84 = scmp.ne.s32.totalorder %s76, %s78
      %p85 = scmp.eq.s32.totalorder %s26, 1
      %p86 = por %p84, %p85
      %p87 = scmp.ne.s32.totalorder %s78, %s79
      %p88 = scmp.eq.s32.totalorder %s26, 0
      %p89 = por %p87, %p88
      %p90 = scmp.ne.s32.totalorder %s78, %s79
      %p91 = scmp.eq.s32.totalorder %s27, 1
      %p92 = por %p90, %p91
      %p94 = scmp.ne.s32.totalorder %s79, %s93
      %p95 = scmp.eq.s32.totalorder %s27, 0
      %p96 = por %p94, %p95
      %s98 = sadd.s32 %s97, 1
      %p101 = scmp.eq.s32.totalorder %s21, 1
      %p102 = scmp.ne.s32.totalorder %s97, %s99
      %p103 = scmp.eq.s32.totalorder %s21, 0
      %p104 = por %p102, %p103
      %p105 = scmp.ne.s32.totalorder %s97, %s99
      %p106 = scmp.eq.s32.totalorder %s26, 1
      %p107 = por %p105, %p106
      %p108 = scmp.ne.s32.totalorder %s99, %s100
      %p109 = scmp.eq.s32.totalorder %s26, 0
      %p110 = por %p108, %p109
      %p111 = scmp.ne.s32.totalorder %s99, %s100
      %p112 = scmp.eq.s32.totalorder %s27, 1
      %p113 = por %p111, %p112
      %p115 = scmp.ne.s32.totalorder %s100, %s114
      %p116 = scmp.eq.s32.totalorder %s27, 0
      %p117 = por %p115, %p116
      %s119 = sadd.s32 %s118, 1
      %p122 = scmp.eq.s32.totalorder %s21, 1
      %p123 = scmp.ne.s32.totalorder %s118, %s120
      %p124 = scmp.eq.s32.totalorder %s21, 0
      %p125 = por %p123, %p124
      %p126 = scmp.ne.s32.totalorder %s118, %s120
      %p127 = scmp.eq.s32.totalorder %s26, 1
      %p128 = por %p126, %p127
      %p129 = scmp.ne.s32.totalorder %s120, %s121
      %p130 = scmp.eq.s32.totalorder %s26, 0
      %p131 = por %p129, %p130
      %p132 = scmp.ne.s32.totalorder %s120, %s121
      %p133 = scmp.eq.s32.totalorder %s27, 1
      %p134 = por %p132, %p133
      %p136 = scmp.ne.s32.totalorder %s121, %s135
      %p137 = scmp.eq.s32.totalorder %s27, 0
      %p138 = por %p136, %p137
      %s140 = sadd.s32 %s139, 1
      %p143 = scmp.eq.s32.totalorder %s21, 1
      %p144 = scmp.ne.s32.totalorder %s139, %s141
      %p145 = scmp.eq.s32.totalorder %s21, 0
      %p146 = por %p144, %p145
      %p147 = scmp.ne.s32.totalorder %s139, %s141
      %p148 = scmp.eq.s32.totalorder %s26, 1
      %p149 = por %p147, %p148
      %p150 = scmp.ne.s32.totalorder %s141, %s142
      %p151 = scmp.eq.s32.totalorder %s26, 0
      %p152 = por %p150, %p151
      %p153 = scmp.ne.s32.totalorder %s141, %s142
      %p154 = scmp.eq.s32.totalorder %s27, 1
      %p155 = por %p153, %p154
      %p157 = scmp.ne.s32.totalorder %s142, %s156
      %p158 = scmp.eq.s32.totalorder %s27, 0
      %p159 = por %p157, %p158
      %s161 = sadd.s32 %s160, 1
      %p164 = scmp.eq.s32.totalorder %s21, 1
      %p165 = scmp.ne.s32.totalorder %s160, %s162
      %p166 = scmp.eq.s32.totalorder %s21, 0
      %p167 = por %p165, %p166
      %p168 = scmp.ne.s32.totalorder %s160, %s162
      %p169 = scmp.eq.s32.totalorder %s26, 1
      %p170 = por %p168, %p169
      %p171 = scmp.ne.s32.totalorder %s162, %s163
      %p172 = scmp.eq.s32.totalorder %s26, 0
      %p173 = por %p171, %p172
      %p174 = scmp.ne.s32.totalorder %s162, %s163
      %p175 = scmp.eq.s32.totalorder %s27, 1
      %p176 = por %p174, %p175
      %p178 = scmp.ne.s32.totalorder %s163, %s177
      %p179 = scmp.eq.s32.totalorder %s27, 0
      %p180 = por %p178, %p179
      %s181 = ssub.s32 %s21, %s28
      %p182 = scmp.eq.s32.totalorder %s181, 0
      %s184 = sadd.s32 %s183, 1
      %s185 = scalar_select %p182, %s183, %s184
      %p188 = pneg %p182
      %p189 = scmp.eq.s32.totalorder %s21, 1
      %p190 = por %p188, %p189
      %p191 = scmp.ne.s32.totalorder %s183, %s186
      %p192 = scmp.eq.s32.totalorder %s21, 0
      %p193 = por %p191, %p192
      %p194 = scmp.ne.s32.totalorder %s183, %s186
      %p195 = scmp.eq.s32.totalorder %s26, 1
      %p196 = por %p194, %p195
      %p197 = scmp.ne.s32.totalorder %s186, %s187
      %p198 = scmp.eq.s32.totalorder %s26, 0
      %p199 = por %p197, %p198
      %p200 = scmp.ne.s32.totalorder %s186, %s187
      %p201 = scmp.eq.s32.totalorder %s27, 1
      %p202 = por %p200, %p201
      %p204 = scmp.ne.s32.totalorder %s187, %s203
      %p205 = scmp.eq.s32.totalorder %s27, 0
      %p206 = por %p204, %p205
      %p207 = scmp.le.s32.totalorder 1, %s21
      %p208 = scmp.lt.s32.totalorder %s21, 3
      %p209 = pnand %p207, %p208
      %p210 = pneg %p209
      // Predicated region
      $region9: #{tpu_custom_call.1} parent=5 // pred_check
        _
      $region10: #{tpu_custom_call.1} parent=5 // pred_check_branch
        %212 = sbr.rel (%p209) target = $region12
      $region11: #{tpu_custom_call.1} parent=5 // pred_region
        %s213 = ssub.s32 %s21, 1
        // Predicated region
        $region13: #{tpu_custom_call.1} parent=11 // pred_check
          %p214 = pneg %p68
        $region14: #{tpu_custom_call.1} parent=11 // pred_check_branch
          %216 = sbr.rel (%p214) target = $region16
        $region15: #{tpu_custom_call.1} parent=11 // pred_region
          %s218 = ssub.s32 1024, 1024
          %219 = vsyncadd [#allocation6], %s218
          %s220 = sshll.u32 [#allocation5], 4
          %s221 = int_to_ptr.vmem [resolvable:$true] %s220
          %226 = dma.hbm_to_vmem [thread:$0]  %s1, 1024, %s221, [#allocation6], 64, 64, 4
        $region16: #{tpu_custom_call.1} parent=11 // pred_fallthru
          _
        // Predicated region
        $region17: #{tpu_custom_call.1} parent=11 // pred_check
          %p227 = pneg %p89
        $region18: #{tpu_custom_call.1} parent=11 // pred_check_branch
          %229 = sbr.rel (%p227) target = $region20
        $region19: #{tpu_custom_call.1} parent=11 // pred_region
          _
        $region20: #{tpu_custom_call.1} parent=11 // pred_fallthru
          _
        // Predicated region
        $region21: #{tpu_custom_call.1} parent=11 // pred_check
          %p230 = pneg %p110
        $region22: #{tpu_custom_call.1} parent=11 // pred_check_branch
          %232 = sbr.rel (%p230) target = $region24
        $region23: #{tpu_custom_call.1} parent=11 // pred_region
          %s234 = ssub.s32 1024, 1024
          %235 = vsyncadd [#allocation6], %s234
          %s236 = sshll.u32 [#allocation7], 4
          %s237 = int_to_ptr.vmem [resolvable:$true] %s236
          %242 = dma.hbm_to_vmem [thread:$0]  %s3, 1024, %s237, [#allocation6], 64, 64, 4
        $region24: #{tpu_custom_call.1} parent=11 // pred_fallthru
          _
        // Predicated region
        $region25: #{tpu_custom_call.1} parent=11 // pred_check
          %p243 = pneg %p131
        $region26: #{tpu_custom_call.1} parent=11 // pred_check_branch
          %245 = sbr.rel (%p243) target = $region28
        $region27: #{tpu_custom_call.1} parent=11 // pred_region
          _
        $region28: #{tpu_custom_call.1} parent=11 // pred_fallthru
          _
        // Predicated region
        $region29: #{tpu_custom_call.1} parent=11 // pred_check
          %p246 = pneg %p152
        $region30: #{tpu_custom_call.1} parent=11 // pred_check_branch
          %248 = sbr.rel (%p246) target = $region32
        $region31: #{tpu_custom_call.1} parent=11 // pred_region
          %s250 = ssub.s32 1024, 1024
          %251 = vsyncadd [#allocation9], %s250
          %s252 = sshll.u32 [#allocation8], 4
          %s253 = int_to_ptr.vmem [resolvable:$true] %s252
          %258 = dma.hbm_to_vmem [thread:$0]  %s5, 1024, %s253, [#allocation9], 64, 64, 4
        $region32: #{tpu_custom_call.1} parent=11 // pred_fallthru
          _
        // Predicated region
        $region33: #{tpu_custom_call.1} parent=11 // pred_check
          %p259 = pneg %p173
        $region34: #{tpu_custom_call.1} parent=11 // pred_check_branch
          %261 = sbr.rel (%p259) target = $region36
        $region35: #{tpu_custom_call.1} parent=11 // pred_region
          _
        $region36: #{tpu_custom_call.1} parent=11 // pred_fallthru
          _
      $region12: #{tpu_custom_call.1} parent=5 // pred_fallthru
        _
      %p262 = scmp.lt.s32.totalorder %s21, 2
      // Predicated region
      $region37: #{tpu_custom_call.1} parent=5 // pred_check
        %p263 = pneg %p262
      $region38: #{tpu_custom_call.1} parent=5 // pred_check_branch
        %265 = sbr.rel (%p263) target = $region40
      $region39: #{tpu_custom_call.1} parent=5 // pred_region
        // Predicated region
        $region41: #{tpu_custom_call.1} parent=39 // pred_check
          %p266 = pneg %p41
        $region42: #{tpu_custom_call.1} parent=39 // pred_check_branch
          %268 = sbr.rel (%p266) target = $region44
        $region43: #{tpu_custom_call.1} parent=39 // pred_region
          %s269 = sand.u32 %s31, 1
          %s270 = scalar_lea.sflag [#allocation3], %s269
          %s271 = sand.u32 %s31, 1
          %s272 = smul.addr %s271, 128
          %s273 = scalar_lea.vmem [#allocation2], %s272
          %s274 = smul.u32 32, %s21
          %s276 = ssub.s32 2048, 2048
          %277 = vsyncadd %s270, %s276
          %s278 = smul.addr %s274, 64
          %s279 = scalar_lea.hbm %s0, %s278
          %s280 = sshll.u32 %s273, 4
          %s281 = int_to_ptr.vmem [resolvable:$true] %s280
          %286 = dma.hbm_to_vmem [thread:$0]  %s279, 2048, %s281, %s270, 64, 64, 4
        $region44: #{tpu_custom_call.1} parent=39 // pred_fallthru
          _
      $region40: #{tpu_custom_call.1} parent=5 // pred_fallthru
        _
      %p287 = scmp.le.s32.totalorder 1, %s21
      %p288 = scmp.lt.s32.totalorder %s21, 3
      %p289 = pnand %p287, %p288
      %p290 = pneg %p289
      // Predicated region
      $region45: #{tpu_custom_call.1} parent=5 // pred_check
        _
      $region46: #{tpu_custom_call.1} parent=5 // pred_check_branch
        %292 = sbr.rel (%p289) target = $region48
      $region47: #{tpu_custom_call.1} parent=5 // pred_region
        %s293 = ssub.s32 %s21, 1
        %s294 = sand.u32 %s34, 1
        %s295 = scalar_lea.sflag [#allocation3], %s294
        %s296 = sand.u32 %s34, 1
        %s297 = smul.addr %s296, 128
        %s298 = scalar_lea.vmem [#allocation2], %s297
        // Predicated region
        $region49: #{tpu_custom_call.1} parent=47 // pred_check
          %p299 = pneg %p47
        $region50: #{tpu_custom_call.1} parent=47 // pred_check_branch
          %301 = sbr.rel (%p299) target = $region52
        $region51: #{tpu_custom_call.1} parent=47 // pred_region
          %302 = dma.done %s295, 2048
        $region52: #{tpu_custom_call.1} parent=47 // pred_fallthru
          _
        // Predicated region
        $region53: #{tpu_custom_call.1} parent=47 // pred_check
          %p303 = pneg %p68
        $region54: #{tpu_custom_call.1} parent=47 // pred_check_branch
          %305 = sbr.rel (%p303) target = $region56
        $region55: #{tpu_custom_call.1} parent=47 // pred_region
          %306 = dma.done [#allocation6], 1024
        $region56: #{tpu_custom_call.1} parent=47 // pred_fallthru
          _
        // Predicated region
        $region57: #{tpu_custom_call.1} parent=47 // pred_check
          %p307 = pneg %p110
        $region58: #{tpu_custom_call.1} parent=47 // pred_check_branch
          %309 = sbr.rel (%p307) target = $region60
        $region59: #{tpu_custom_call.1} parent=47 // pred_region
          %310 = dma.done [#allocation6], 1024
        $region60: #{tpu_custom_call.1} parent=47 // pred_fallthru
          _
        // Predicated region
        $region61: #{tpu_custom_call.1} parent=47 // pred_check
          %p311 = pneg %p152
        $region62: #{tpu_custom_call.1} parent=47 // pred_check_branch
          %313 = sbr.rel (%p311) target = $region64
        $region63: #{tpu_custom_call.1} parent=47 // pred_region
          %314 = dma.done [#allocation9], 1024
        $region64: #{tpu_custom_call.1} parent=47 // pred_fallthru
          _
        %s315 = sand.u32 %s34, 1
        %s316 = scalar_lea.sflag [#allocation3], %s315
        %s317 = sand.u32 %s34, 1
        %s318 = smul.addr %s317, 128
        %s319 = scalar_lea.vmem [#allocation2], %s318
        %p320 = pneg %p47
        %p321 = pneg %p44
        %p322 = pneg %p68
        %p323 = pneg %p65
        %p324 = pneg %p89
        %p325 = pneg %p86
        %p326 = pneg %p110
        %p327 = pneg %p107
        %p328 = pneg %p131
        %p329 = pneg %p128
        %p330 = pneg %p152
        %p331 = pneg %p149
        %p332 = pneg %p173
        %p333 = pneg %p170
        %p334 = pneg %p199
        %p335 = pneg %p196
        %s336 = sand.u32 %s186, 1
        %s337 = scalar_lea.sflag [#allocation4], %s336
        %s338 = sand.u32 %s186, 1
        %s339 = smul.addr %s338, 128
        %s340 = scalar_lea.vmem [#allocation10], %s339
        %s341 = smul.u32 32, %s26
        %s342 = smul.u32 32, %s26
        %v344 = vld [vmem:[%s298] sm:$0xf]
        %v345 = vld [vmem:[%s298 + $0x4] sm:$0xf]
        %v346 = vld [vmem:[%s298 + $0x8] sm:$0xf]
        %v347 = vld [vmem:[%s298 + $0xc] sm:$0xf]
        %v348 = vld [vmem:[%s298 + $0x10] sm:$0xf]
        %v349 = vld [vmem:[%s298 + $0x14] sm:$0xf]
        %v350 = vld [vmem:[%s298 + $0x18] sm:$0xf]
        %v351 = vld [vmem:[%s298 + $0x1c] sm:$0xf]
        %v352 = vld [vmem:[%s298 + $0x20] sm:$0xf]
        %v353 = vld [vmem:[%s298 + $0x24] sm:$0xf]
        %v354 = vld [vmem:[%s298 + $0x28] sm:$0xf]
        %v355 = vld [vmem:[%s298 + $0x2c] sm:$0xf]
        %v356 = vld [vmem:[%s298 + $0x30] sm:$0xf]
        %v357 = vld [vmem:[%s298 + $0x34] sm:$0xf]
        %v358 = vld [vmem:[%s298 + $0x38] sm:$0xf]
        %v359 = vld [vmem:[%s298 + $0x3c] sm:$0xf]
        %v360 = vld [vmem:[%s298 + $0x40] sm:$0xf]
        %v361 = vld [vmem:[%s298 + $0x44] sm:$0xf]
        %v362 = vld [vmem:[%s298 + $0x48] sm:$0xf]
        %v363 = vld [vmem:[%s298 + $0x4c] sm:$0xf]
        %v364 = vld [vmem:[%s298 + $0x50] sm:$0xf]
        %v365 = vld [vmem:[%s298 + $0x54] sm:$0xf]
        %v366 = vld [vmem:[%s298 + $0x58] sm:$0xf]
        %v367 = vld [vmem:[%s298 + $0x5c] sm:$0xf]
        %v368 = vld [vmem:[%s298 + $0x60] sm:$0xf]
        %v369 = vld [vmem:[%s298 + $0x64] sm:$0xf]
        %v370 = vld [vmem:[%s298 + $0x68] sm:$0xf]
        %v371 = vld [vmem:[%s298 + $0x6c] sm:$0xf]
        %v372 = vld [vmem:[%s298 + $0x70] sm:$0xf]
        %v373 = vld [vmem:[%s298 + $0x74] sm:$0xf]
        %v374 = vld [vmem:[%s298 + $0x78] sm:$0xf]
        %v375 = vld [vmem:[%s298 + $0x7c] sm:$0xf]
        %v376 = vld [vmem:[#allocation5] sm:$0xf]
        %v377 = vld [vmem:[#allocation5 + $0x4] sm:$0xf]
        %v378 = vld [vmem:[#allocation5 + $0x8] sm:$0xf]
        %v379 = vld [vmem:[#allocation5 + $0xc] sm:$0xf]
        %v380 = vld [vmem:[#allocation5 + $0x10] sm:$0xf]
        %v381 = vld [vmem:[#allocation5 + $0x14] sm:$0xf]
        %v382 = vld [vmem:[#allocation5 + $0x18] sm:$0xf]
        %v383 = vld [vmem:[#allocation5 + $0x1c] sm:$0xf]
        %v384 = vld [vmem:[#allocation5 + $0x20] sm:$0xf]
        %v385 = vld [vmem:[#allocation5 + $0x24] sm:$0xf]
        %v386 = vld [vmem:[#allocation5 + $0x28] sm:$0xf]
        %v387 = vld [vmem:[#allocation5 + $0x2c] sm:$0xf]
        %v388 = vld [vmem:[#allocation5 + $0x30] sm:$0xf]
        %v389 = vld [vmem:[#allocation5 + $0x34] sm:$0xf]
        %v390 = vld [vmem:[#allocation5 + $0x38] sm:$0xf]
        %v391 = vld [vmem:[#allocation5 + $0x3c] sm:$0xf]
        %v392 = vld [vmem:[%s2] sm:$0x1]
        %v393 = vunpack.c.l.bf16 %v392
        %v394 = vlaneseq
        %v395 = vshrl.u32 %v394, 7
        %v396 = vsub.s32 0, %v395
        %v397 = vrot.slane %v393, %v396
        %v430 = vunpack.c.l.b16 %v344
        %v431 = vunpack.c.l.b16 %v345
        %v432 = vunpack.c.l.b16 %v346
        %v433 = vunpack.c.l.b16 %v347
        %v434 = vunpack.c.l.b16 %v348
        %v435 = vunpack.c.l.b16 %v349
        %v436 = vunpack.c.l.b16 %v350
        %v437 = vunpack.c.l.b16 %v351
        %v438 = vunpack.c.l.b16 %v352
        %v439 = vunpack.c.l.b16 %v353
        %v440 = vunpack.c.l.b16 %v354
        %v441 = vunpack.c.l.b16 %v355
        %v442 = vunpack.c.l.b16 %v356
        %v443 = vunpack.c.l.b16 %v357
        %v444 = vunpack.c.l.b16 %v358
        %v445 = vunpack.c.l.b16 %v359
        %v446 = vunpack.c.l.b16 %v360
        %v447 = vunpack.c.l.b16 %v361
        %v448 = vunpack.c.l.b16 %v362
        %v449 = vunpack.c.l.b16 %v363
        %v450 = vunpack.c.l.b16 %v364
        %v451 = vunpack.c.l.b16 %v365
        %v452 = vunpack.c.l.b16 %v366
        %v453 = vunpack.c.l.b16 %v367
        %v454 = vunpack.c.l.b16 %v368
        %v455 = vunpack.c.l.b16 %v369
        %v456 = vunpack.c.l.b16 %v370
        %v457 = vunpack.c.l.b16 %v371
        %v458 = vunpack.c.l.b16 %v372
        %v459 = vunpack.c.l.b16 %v373
        %v460 = vunpack.c.l.b16 %v374
        %v461 = vunpack.c.l.b16 %v375
        %v462 = vpack.c.b16 %v431, %v430
        %v463 = vpack.c.b16 %v433, %v432
        %v464 = vpack.c.b16 %v435, %v434
        %v465 = vpack.c.b16 %v437, %v436
        %v466 = vpack.c.b16 %v439, %v438
        %v467 = vpack.c.b16 %v441, %v440
        %v468 = vpack.c.b16 %v443, %v442
        %v469 = vpack.c.b16 %v445, %v444
        %v470 = vpack.c.b16 %v447, %v446
        %v471 = vpack.c.b16 %v449, %v448
        %v472 = vpack.c.b16 %v451, %v450
        %v473 = vpack.c.b16 %v453, %v452
        %v474 = vpack.c.b16 %v455, %v454
        %v475 = vpack.c.b16 %v457, %v456
        %v476 = vpack.c.b16 %v459, %v458
        %v477 = vpack.c.b16 %v461, %v460
        %v510 = vunpack.c.l.b16 %v376
        %v511 = vunpack.c.l.b16 %v377
        %v512 = vunpack.c.l.b16 %v378
        %v513 = vunpack.c.l.b16 %v379
        %v514 = vunpack.c.l.b16 %v380
        %v515 = vunpack.c.l.b16 %v381
        %v516 = vunpack.c.l.b16 %v382
        %v517 = vunpack.c.l.b16 %v383
        %v518 = vunpack.c.l.b16 %v384
        %v519 = vunpack.c.l.b16 %v385
        %v520 = vunpack.c.l.b16 %v386
        %v521 = vunpack.c.l.b16 %v387
        %v522 = vunpack.c.l.b16 %v388
        %v523 = vunpack.c.l.b16 %v389
        %v524 = vunpack.c.l.b16 %v390
        %v525 = vunpack.c.l.b16 %v391
        %v526 = vpack.c.b16 %v511, %v510
        %v527 = vpack.c.b16 %v513, %v512
        %v528 = vpack.c.b16 %v515, %v514
        %v529 = vpack.c.b16 %v517, %v516
        %v530 = vpack.c.b16 %v519, %v518
        %v531 = vpack.c.b16 %v521, %v520
        %v532 = vpack.c.b16 %v523, %v522
        %v533 = vpack.c.b16 %v525, %v524
        %542 = vmatprep.subr.bf16.mxu0 0
        %543 = vmatpush1.bf16.msra.mxu0 %v533
        %544 = vmatprep.subr.bf16.mxu0 0
        %545 = vmatpush1.bf16.msra.mxu0 %v532
        %546 = vmatprep.subr.bf16.mxu0 0
        %547 = vmatpush1.bf16.msra.mxu0 %v531
        %548 = vmatprep.subr.bf16.mxu0 0
        %549 = vmatpush1.bf16.msra.mxu0 %v530
        %550 = vmatprep.subr.bf16.mxu0 0
        %551 = vmatpush1.bf16.msra.mxu0 %v529
        %552 = vmatprep.subr.bf16.mxu0 0
        %553 = vmatpush1.bf16.msra.mxu0 %v528
        %554 = vmatprep.subr.bf16.mxu0 0
        %555 = vmatpush1.bf16.msra.mxu0 %v527
        %556 = vmatprep.subr.bf16.mxu0 0
        %557 = vmatpush1.bf16.msra.mxu0 %v526
        %558 = vmatprep.subr.bf16.mxu0 0
        %559 = vmatpush2.bf16.msra.mxu0 0
        %560 = vmatprep.subr.bf16.mxu0 0
        %561 = vmatpush2.bf16.msra.mxu0 0
        %562 = vmatprep.subr.bf16.mxu0 0
        %563 = vmatpush2.bf16.msra.mxu0 0
        %564 = vmatprep.subr.bf16.mxu0 0
        %565 = vmatpush2.bf16.msra.mxu0 0
        %566 = vmatprep.subr.bf16.mxu0 0
        %567 = vmatpush2.bf16.msra.mxu0 0
        %568 = vmatprep.subr.bf16.mxu0 0
        %569 = vmatpush2.bf16.msra.mxu0 0
        %570 = vmatprep.subr.bf16.mxu0 0
        %571 = vmatpush2.bf16.msra.mxu0 0
        %572 = vmatprep.subr.bf16.mxu0 0
        %573 = vmatpush2.bf16.msra.mxu0 0
        %574 = vmatprep.mubr.bf16.mxu0 0
        %575 = vmatmul.mubr.bf16.gmra.mxu0 %v462
        %v576 = vpop.f32.mrf.mxu0
        %v577 = vadd.f32 %v397, %v576
        %v578 = vpop.f32.mrf.mxu0
        %v579 = vpop.f32.mrf.mxu0
        %v580 = vadd.f32 %v397, %v579
        %v581 = vpop.f32.mrf.mxu0
        %582 = vmatprep.mubr.bf16.mxu0 0
        %583 = vmatmul.mubr.bf16.gmra.mxu0 %v463
        %v584 = vpop.f32.mrf.mxu0
        %v585 = vadd.f32 %v397, %v584
        %v586 = vpop.f32.mrf.mxu0
        %v587 = vpop.f32.mrf.mxu0
        %v588 = vadd.f32 %v397, %v587
        %v589 = vpop.f32.mrf.mxu0
        %590 = vmatprep.mubr.bf16.mxu0 0
        %591 = vmatmul.mubr.bf16.gmra.mxu0 %v464
        %v592 = vpop.f32.mrf.mxu0
        %v593 = vadd.f32 %v397, %v592
        %v594 = vpop.f32.mrf.mxu0
        %v595 = vpop.f32.mrf.mxu0
        %v596 = vadd.f32 %v397, %v595
        %v597 = vpop.f32.mrf.mxu0
        %598 = vmatprep.mubr.bf16.mxu0 0
        %599 = vmatmul.mubr.bf16.gmra.mxu0 %v465
        %v600 = vpop.f32.mrf.mxu0
        %v601 = vadd.f32 %v397, %v600
        %v602 = vpop.f32.mrf.mxu0
        %v603 = vpop.f32.mrf.mxu0
        %v604 = vadd.f32 %v397, %v603
        %v605 = vpop.f32.mrf.mxu0
        %606 = vmatprep.mubr.bf16.mxu0 0
        %607 = vmatmul.mubr.bf16.gmra.mxu0 %v466
        %v608 = vpop.f32.mrf.mxu0
        %v609 = vadd.f32 %v397, %v608
        %v610 = vpop.f32.mrf.mxu0
        %v611 = vpop.f32.mrf.mxu0
        %v612 = vadd.f32 %v397, %v611
        %v613 = vpop.f32.mrf.mxu0
        %614 = vmatprep.mubr.bf16.mxu0 0
        %615 = vmatmul.mubr.bf16.gmra.mxu0 %v467
        %v616 = vpop.f32.mrf.mxu0
        %v617 = vadd.f32 %v397, %v616
        %v618 = vpop.f32.mrf.mxu0
        %v619 = vpop.f32.mrf.mxu0
        %v620 = vadd.f32 %v397, %v619
        %v621 = vpop.f32.mrf.mxu0
        %622 = vmatprep.mubr.bf16.mxu0 0
        %623 = vmatmul.mubr.bf16.gmra.mxu0 %v468
        %v624 = vpop.f32.mrf.mxu0
        %v625 = vadd.f32 %v397, %v624
        %v626 = vpop.f32.mrf.mxu0
        %v627 = vpop.f32.mrf.mxu0
        %v628 = vadd.f32 %v397, %v627
        %v629 = vpop.f32.mrf.mxu0
        %630 = vmatprep.mubr.bf16.mxu0 0
        %631 = vmatmul.mubr.bf16.gmra.mxu0 %v469
        %v632 = vpop.f32.mrf.mxu0
        %v633 = vadd.f32 %v397, %v632
        %v634 = vpop.f32.mrf.mxu0
        %v635 = vpop.f32.mrf.mxu0
        %v636 = vadd.f32 %v397, %v635
        %v637 = vpop.f32.mrf.mxu0
        %638 = vmatprep.mubr.bf16.mxu0 0
        %639 = vmatmul.mubr.bf16.gmra.mxu0 %v470
        %v640 = vpop.f32.mrf.mxu0
        %v641 = vadd.f32 %v397, %v640
        %v642 = vpop.f32.mrf.mxu0
        %v643 = vpop.f32.mrf.mxu0
        %v644 = vadd.f32 %v397, %v643
        %v645 = vpop.f32.mrf.mxu0
        %646 = vmatprep.mubr.bf16.mxu0 0
        %647 = vmatmul.mubr.bf16.gmra.mxu0 %v471
        %v648 = vpop.f32.mrf.mxu0
        %v649 = vadd.f32 %v397, %v648
        %v650 = vpop.f32.mrf.mxu0
        %v651 = vpop.f32.mrf.mxu0
        %v652 = vadd.f32 %v397, %v651
        %v653 = vpop.f32.mrf.mxu0
        %654 = vmatprep.mubr.bf16.mxu0 0
        %655 = vmatmul.mubr.bf16.gmra.mxu0 %v472
        %v656 = vpop.f32.mrf.mxu0
        %v657 = vadd.f32 %v397, %v656
        %v658 = vpop.f32.mrf.mxu0
        %v659 = vpop.f32.mrf.mxu0
        %v660 = vadd.f32 %v397, %v659
        %v661 = vpop.f32.mrf.mxu0
        %662 = vmatprep.mubr.bf16.mxu0 0
        %663 = vmatmul.mubr.bf16.gmra.mxu0 %v473
        %v664 = vpop.f32.mrf.mxu0
        %v665 = vadd.f32 %v397, %v664
        %v666 = vpop.f32.mrf.mxu0
        %v667 = vpop.f32.mrf.mxu0
        %v668 = vadd.f32 %v397, %v667
        %v669 = vpop.f32.mrf.mxu0
        %670 = vmatprep.mubr.bf16.mxu0 0
        %671 = vmatmul.mubr.bf16.gmra.mxu0 %v474
        %v672 = vpop.f32.mrf.mxu0
        %v673 = vadd.f32 %v397, %v672
        %v674 = vpop.f32.mrf.mxu0
        %v675 = vpop.f32.mrf.mxu0
        %v676 = vadd.f32 %v397, %v675
        %v677 = vpop.f32.mrf.mxu0
        %678 = vmatprep.mubr.bf16.mxu0 0
        %679 = vmatmul.mubr.bf16.gmra.mxu0 %v475
        %v680 = vpop.f32.mrf.mxu0
        %v681 = vadd.f32 %v397, %v680
        %v682 = vpop.f32.mrf.mxu0
        %v683 = vpop.f32.mrf.mxu0
        %v684 = vadd.f32 %v397, %v683
        %v685 = vpop.f32.mrf.mxu0
        %686 = vmatprep.mubr.bf16.mxu0 0
        %687 = vmatmul.mubr.bf16.gmra.mxu0 %v476
        %v688 = vpop.f32.mrf.mxu0
        %v689 = vadd.f32 %v397, %v688
        %v690 = vpop.f32.mrf.mxu0
        %v691 = vpop.f32.mrf.mxu0
        %v692 = vadd.f32 %v397, %v691
        %v693 = vpop.f32.mrf.mxu0
        %694 = vmatprep.mubr.bf16.mxu0 0
        %695 = vmatmul.mubr.bf16.gmra.mxu0 %v477
        %v696 = vpop.f32.mrf.mxu0
        %v697 = vadd.f32 %v397, %v696
        %v698 = vpop.f32.mrf.mxu0
        %v699 = vpop.f32.mrf.mxu0
        %v700 = vadd.f32 %v397, %v699
        %v701 = vpop.f32.mrf.mxu0
        %702 = vdwg.mxu0
        %v703 = vpack.c.bf16 %v580, %v577
        %v704 = vpack.c.bf16 %v588, %v585
        %v705 = vpack.c.bf16 %v596, %v593
        %v706 = vpack.c.bf16 %v604, %v601
        %v707 = vpack.c.bf16 %v612, %v609
        %v708 = vpack.c.bf16 %v620, %v617
        %v709 = vpack.c.bf16 %v628, %v625
        %v710 = vpack.c.bf16 %v636, %v633
        %v711 = vpack.c.bf16 %v644, %v641
        %v712 = vpack.c.bf16 %v652, %v649
        %v713 = vpack.c.bf16 %v660, %v657
        %v714 = vpack.c.bf16 %v668, %v665
        %v715 = vpack.c.bf16 %v676, %v673
        %v716 = vpack.c.bf16 %v684, %v681
        %v717 = vpack.c.bf16 %v692, %v689
        %v718 = vpack.c.bf16 %v700, %v697
        %v719 = vld [vmem:[#allocation7] sm:$0xf]
        %v720 = vld [vmem:[#allocation7 + $0x4] sm:$0xf]
        %v721 = vld [vmem:[#allocation7 + $0x8] sm:$0xf]
        %v722 = vld [vmem:[#allocation7 + $0xc] sm:$0xf]
        %v723 = vld [vmem:[#allocation7 + $0x10] sm:$0xf]
        %v724 = vld [vmem:[#allocation7 + $0x14] sm:$0xf]
        %v725 = vld [vmem:[#allocation7 + $0x18] sm:$0xf]
        %v726 = vld [vmem:[#allocation7 + $0x1c] sm:$0xf]
        %v727 = vld [vmem:[#allocation7 + $0x20] sm:$0xf]
        %v728 = vld [vmem:[#allocation7 + $0x24] sm:$0xf]
        %v729 = vld [vmem:[#allocation7 + $0x28] sm:$0xf]
        %v730 = vld [vmem:[#allocation7 + $0x2c] sm:$0xf]
        %v731 = vld [vmem:[#allocation7 + $0x30] sm:$0xf]
        %v732 = vld [vmem:[#allocation7 + $0x34] sm:$0xf]
        %v733 = vld [vmem:[#allocation7 + $0x38] sm:$0xf]
        %v734 = vld [vmem:[#allocation7 + $0x3c] sm:$0xf]
        %v735 = vld [vmem:[%s4] sm:$0x1]
        %v736 = vunpack.c.l.bf16 %v735
        %v737 = vlaneseq
        %v738 = vshrl.u32 %v737, 7
        %v739 = vsub.s32 0, %v738
        %v740 = vrot.slane %v736, %v739
        %v757 = vunpack.c.l.b16 %v719
        %v758 = vunpack.c.l.b16 %v720
        %v759 = vunpack.c.l.b16 %v721
        %v760 = vunpack.c.l.b16 %v722
        %v761 = vunpack.c.l.b16 %v723
        %v762 = vunpack.c.l.b16 %v724
        %v763 = vunpack.c.l.b16 %v725
        %v764 = vunpack.c.l.b16 %v726
        %v765 = vunpack.c.l.b16 %v727
        %v766 = vunpack.c.l.b16 %v728
        %v767 = vunpack.c.l.b16 %v729
        %v768 = vunpack.c.l.b16 %v730
        %v769 = vunpack.c.l.b16 %v731
        %v770 = vunpack.c.l.b16 %v732
        %v771 = vunpack.c.l.b16 %v733
        %v772 = vunpack.c.l.b16 %v734
        %v773 = vpack.c.b16 %v758, %v757
        %v774 = vpack.c.b16 %v760, %v759
        %v775 = vpack.c.b16 %v762, %v761
        %v776 = vpack.c.b16 %v764, %v763
        %v777 = vpack.c.b16 %v766, %v765
        %v778 = vpack.c.b16 %v768, %v767
        %v779 = vpack.c.b16 %v770, %v769
        %v780 = vpack.c.b16 %v772, %v771
        %789 = vmatprep.subr.bf16.mxu0 0
        %790 = vmatpush1.bf16.msra.mxu0 %v780
        %791 = vmatprep.subr.bf16.mxu0 0
        %792 = vmatpush1.bf16.msra.mxu0 %v779
        %793 = vmatprep.subr.bf16.mxu0 0
        %794 = vmatpush1.bf16.msra.mxu0 %v778
        %795 = vmatprep.subr.bf16.mxu0 0
        %796 = vmatpush1.bf16.msra.mxu0 %v777
        %797 = vmatprep.subr.bf16.mxu0 0
        %798 = vmatpush1.bf16.msra.mxu0 %v776
        %799 = vmatprep.subr.bf16.mxu0 0
        %800 = vmatpush1.bf16.msra.mxu0 %v775
        %801 = vmatprep.subr.bf16.mxu0 0
        %802 = vmatpush1.bf16.msra.mxu0 %v774
        %803 = vmatprep.subr.bf16.mxu0 0
        %804 = vmatpush1.bf16.msra.mxu0 %v773
        %805 = vmatprep.subr.bf16.mxu0 0
        %806 = vmatpush2.bf16.msra.mxu0 0
        %807 = vmatprep.subr.bf16.mxu0 0
        %808 = vmatpush2.bf16.msra.mxu0 0
        %809 = vmatprep.subr.bf16.mxu0 0
        %810 = vmatpush2.bf16.msra.mxu0 0
        %811 = vmatprep.subr.bf16.mxu0 0
        %812 = vmatpush2.bf16.msra.mxu0 0
        %813 = vmatprep.subr.bf16.mxu0 0
        %814 = vmatpush2.bf16.msra.mxu0 0
        %815 = vmatprep.subr.bf16.mxu0 0
        %816 = vmatpush2.bf16.msra.mxu0 0
        %817 = vmatprep.subr.bf16.mxu0 0
        %818 = vmatpush2.bf16.msra.mxu0 0
        %819 = vmatprep.subr.bf16.mxu0 0
        %820 = vmatpush2.bf16.msra.mxu0 0
        %821 = vmatprep.mubr.bf16.mxu0 0
        %822 = vmatmul.mubr.bf16.gmra.mxu0 %v703
        %v823 = vpop.f32.mrf.mxu0
        %v824 = vadd.f32 %v740, %v823
        %v825 = vpop.f32.mrf.mxu0
        %v826 = vpop.f32.mrf.mxu0
        %v827 = vadd.f32 %v740, %v826
        %v828 = vpop.f32.mrf.mxu0
        %829 = vmatprep.mubr.bf16.mxu0 0
        %830 = vmatmul.mubr.bf16.gmra.mxu0 %v704
        %v831 = vpop.f32.mrf.mxu0
        %v832 = vadd.f32 %v740, %v831
        %v833 = vpop.f32.mrf.mxu0
        %v834 = vpop.f32.mrf.mxu0
        %v835 = vadd.f32 %v740, %v834
        %v836 = vpop.f32.mrf.mxu0
        %837 = vmatprep.mubr.bf16.mxu0 0
        %838 = vmatmul.mubr.bf16.gmra.mxu0 %v705
        %v839 = vpop.f32.mrf.mxu0
        %v840 = vadd.f32 %v740, %v839
        %v841 = vpop.f32.mrf.mxu0
        %v842 = vpop.f32.mrf.mxu0
        %v843 = vadd.f32 %v740, %v842
        %v844 = vpop.f32.mrf.mxu0
        %845 = vmatprep.mubr.bf16.mxu0 0
        %846 = vmatmul.mubr.bf16.gmra.mxu0 %v706
        %v847 = vpop.f32.mrf.mxu0
        %v848 = vadd.f32 %v740, %v847
        %v849 = vpop.f32.mrf.mxu0
        %v850 = vpop.f32.mrf.mxu0
        %v851 = vadd.f32 %v740, %v850
        %v852 = vpop.f32.mrf.mxu0
        %853 = vmatprep.mubr.bf16.mxu0 0
        %854 = vmatmul.mubr.bf16.gmra.mxu0 %v707
        %v855 = vpop.f32.mrf.mxu0
        %v856 = vadd.f32 %v740, %v855
        %v857 = vpop.f32.mrf.mxu0
        %v858 = vpop.f32.mrf.mxu0
        %v859 = vadd.f32 %v740, %v858
        %v860 = vpop.f32.mrf.mxu0
        %861 = vmatprep.mubr.bf16.mxu0 0
        %862 = vmatmul.mubr.bf16.gmra.mxu0 %v708
        %v863 = vpop.f32.mrf.mxu0
        %v864 = vadd.f32 %v740, %v863
        %v865 = vpop.f32.mrf.mxu0
        %v866 = vpop.f32.mrf.mxu0
        %v867 = vadd.f32 %v740, %v866
        %v868 = vpop.f32.mrf.mxu0
        %869 = vmatprep.mubr.bf16.mxu0 0
        %870 = vmatmul.mubr.bf16.gmra.mxu0 %v709
        %v871 = vpop.f32.mrf.mxu0
        %v872 = vadd.f32 %v740, %v871
        %v873 = vpop.f32.mrf.mxu0
        %v874 = vpop.f32.mrf.mxu0
        %v875 = vadd.f32 %v740, %v874
        %v876 = vpop.f32.mrf.mxu0
        %877 = vmatprep.mubr.bf16.mxu0 0
        %878 = vmatmul.mubr.bf16.gmra.mxu0 %v710
        %v879 = vpop.f32.mrf.mxu0
        %v880 = vadd.f32 %v740, %v879
        %v881 = vpop.f32.mrf.mxu0
        %v882 = vpop.f32.mrf.mxu0
        %v883 = vadd.f32 %v740, %v882
        %v884 = vpop.f32.mrf.mxu0
        %885 = vmatprep.mubr.bf16.mxu0 0
        %886 = vmatmul.mubr.bf16.gmra.mxu0 %v711
        %v887 = vpop.f32.mrf.mxu0
        %v888 = vadd.f32 %v740, %v887
        %v889 = vpop.f32.mrf.mxu0
        %v890 = vpop.f32.mrf.mxu0
        %v891 = vadd.f32 %v740, %v890
        %v892 = vpop.f32.mrf.mxu0
        %893 = vmatprep.mubr.bf16.mxu0 0
        %894 = vmatmul.mubr.bf16.gmra.mxu0 %v712
        %v895 = vpop.f32.mrf.mxu0
        %v896 = vadd.f32 %v740, %v895
        %v897 = vpop.f32.mrf.mxu0
        %v898 = vpop.f32.mrf.mxu0
        %v899 = vadd.f32 %v740, %v898
        %v900 = vpop.f32.mrf.mxu0
        %901 = vmatprep.mubr.bf16.mxu0 0
        %902 = vmatmul.mubr.bf16.gmra.mxu0 %v713
        %v903 = vpop.f32.mrf.mxu0
        %v904 = vadd.f32 %v740, %v903
        %v905 = vpop.f32.mrf.mxu0
        %v906 = vpop.f32.mrf.mxu0
        %v907 = vadd.f32 %v740, %v906
        %v908 = vpop.f32.mrf.mxu0
        %909 = vmatprep.mubr.bf16.mxu0 0
        %910 = vmatmul.mubr.bf16.gmra.mxu0 %v714
        %v911 = vpop.f32.mrf.mxu0
        %v912 = vadd.f32 %v740, %v911
        %v913 = vpop.f32.mrf.mxu0
        %v914 = vpop.f32.mrf.mxu0
        %v915 = vadd.f32 %v740, %v914
        %v916 = vpop.f32.mrf.mxu0
        %917 = vmatprep.mubr.bf16.mxu0 0
        %918 = vmatmul.mubr.bf16.gmra.mxu0 %v715
        %v919 = vpop.f32.mrf.mxu0
        %v920 = vadd.f32 %v740, %v919
        %v921 = vpop.f32.mrf.mxu0
        %v922 = vpop.f32.mrf.mxu0
        %v923 = vadd.f32 %v740, %v922
        %v924 = vpop.f32.mrf.mxu0
        %925 = vmatprep.mubr.bf16.mxu0 0
        %926 = vmatmul.mubr.bf16.gmra.mxu0 %v716
        %v927 = vpop.f32.mrf.mxu0
        %v928 = vadd.f32 %v740, %v927
        %v929 = vpop.f32.mrf.mxu0
        %v930 = vpop.f32.mrf.mxu0
        %v931 = vadd.f32 %v740, %v930
        %v932 = vpop.f32.mrf.mxu0
        %933 = vmatprep.mubr.bf16.mxu0 0
        %934 = vmatmul.mubr.bf16.gmra.mxu0 %v717
        %v935 = vpop.f32.mrf.mxu0
        %v936 = vadd.f32 %v740, %v935
        %v937 = vpop.f32.mrf.mxu0
        %v938 = vpop.f32.mrf.mxu0
        %v939 = vadd.f32 %v740, %v938
        %v940 = vpop.f32.mrf.mxu0
        %941 = vmatprep.mubr.bf16.mxu0 0
        %942 = vmatmul.mubr.bf16.gmra.mxu0 %v718
        %v943 = vpop.f32.mrf.mxu0
        %v944 = vadd.f32 %v740, %v943
        %v945 = vpop.f32.mrf.mxu0
        %v946 = vpop.f32.mrf.mxu0
        %v947 = vadd.f32 %v740, %v946
        %v948 = vpop.f32.mrf.mxu0
        %949 = vdwg.mxu0
        %v950 = vpack.c.bf16 %v827, %v824
        %v951 = vpack.c.bf16 %v835, %v832
        %v952 = vpack.c.bf16 %v843, %v840
        %v953 = vpack.c.bf16 %v851, %v848
        %v954 = vpack.c.bf16 %v859, %v856
        %v955 = vpack.c.bf16 %v867, %v864
        %v956 = vpack.c.bf16 %v875, %v872
        %v957 = vpack.c.bf16 %v883, %v880
        %v958 = vpack.c.bf16 %v891, %v888
        %v959 = vpack.c.bf16 %v899, %v896
        %v960 = vpack.c.bf16 %v907, %v904
        %v961 = vpack.c.bf16 %v915, %v912
        %v962 = vpack.c.bf16 %v923, %v920
        %v963 = vpack.c.bf16 %v931, %v928
        %v964 = vpack.c.bf16 %v939, %v936
        %v965 = vpack.c.bf16 %v947, %v944
        %v966 = vld [vmem:[#allocation8] sm:$0xf]
        %v967 = vld [vmem:[#allocation8 + $0x4] sm:$0xf]
        %v968 = vld [vmem:[#allocation8 + $0x8] sm:$0xf]
        %v969 = vld [vmem:[#allocation8 + $0xc] sm:$0xf]
        %v970 = vld [vmem:[#allocation8 + $0x10] sm:$0xf]
        %v971 = vld [vmem:[#allocation8 + $0x14] sm:$0xf]
        %v972 = vld [vmem:[#allocation8 + $0x18] sm:$0xf]
        %v973 = vld [vmem:[#allocation8 + $0x1c] sm:$0xf]
        %v974 = vld [vmem:[#allocation8 + $0x20] sm:$0xf]
        %v975 = vld [vmem:[#allocation8 + $0x24] sm:$0xf]
        %v976 = vld [vmem:[#allocation8 + $0x28] sm:$0xf]
        %v977 = vld [vmem:[#allocation8 + $0x2c] sm:$0xf]
        %v978 = vld [vmem:[#allocation8 + $0x30] sm:$0xf]
        %v979 = vld [vmem:[#allocation8 + $0x34] sm:$0xf]
        %v980 = vld [vmem:[#allocation8 + $0x38] sm:$0xf]
        %v981 = vld [vmem:[#allocation8 + $0x3c] sm:$0xf]
        %v982 = vld [vmem:[%s6] sm:$0x1]
        %v983 = vunpack.c.l.bf16 %v982
        %v984 = vlaneseq
        %v985 = vshrl.u32 %v984, 7
        %v986 = vsub.s32 0, %v985
        %v987 = vrot.slane %v983, %v986
        %v1004 = vunpack.c.l.b16 %v966
        %v1005 = vunpack.c.l.b16 %v967
        %v1006 = vunpack.c.l.b16 %v968
        %v1007 = vunpack.c.l.b16 %v969
        %v1008 = vunpack.c.l.b16 %v970
        %v1009 = vunpack.c.l.b16 %v971
        %v1010 = vunpack.c.l.b16 %v972
        %v1011 = vunpack.c.l.b16 %v973
        %v1012 = vunpack.c.l.b16 %v974
        %v1013 = vunpack.c.l.b16 %v975
        %v1014 = vunpack.c.l.b16 %v976
        %v1015 = vunpack.c.l.b16 %v977
        %v1016 = vunpack.c.l.b16 %v978
        %v1017 = vunpack.c.l.b16 %v979
        %v1018 = vunpack.c.l.b16 %v980
        %v1019 = vunpack.c.l.b16 %v981
        %v1020 = vpack.c.b16 %v1005, %v1004
        %v1021 = vpack.c.b16 %v1007, %v1006
        %v1022 = vpack.c.b16 %v1009, %v1008
        %v1023 = vpack.c.b16 %v1011, %v1010
        %v1024 = vpack.c.b16 %v1013, %v1012
        %v1025 = vpack.c.b16 %v1015, %v1014
        %v1026 = vpack.c.b16 %v1017, %v1016
        %v1027 = vpack.c.b16 %v1019, %v1018
        %1036 = vmatprep.subr.bf16.mxu0 0
        %1037 = vmatpush1.bf16.msra.mxu0 %v1027
        %1038 = vmatprep.subr.bf16.mxu0 0
        %1039 = vmatpush1.bf16.msra.mxu0 %v1026
        %1040 = vmatprep.subr.bf16.mxu0 0
        %1041 = vmatpush1.bf16.msra.mxu0 %v1025
        %1042 = vmatprep.subr.bf16.mxu0 0
        %1043 = vmatpush1.bf16.msra.mxu0 %v1024
        %1044 = vmatprep.subr.bf16.mxu0 0
        %1045 = vmatpush1.bf16.msra.mxu0 %v1023
        %1046 = vmatprep.subr.bf16.mxu0 0
        %1047 = vmatpush1.bf16.msra.mxu0 %v1022
        %1048 = vmatprep.subr.bf16.mxu0 0
        %1049 = vmatpush1.bf16.msra.mxu0 %v1021
        %1050 = vmatprep.subr.bf16.mxu0 0
        %1051 = vmatpush1.bf16.msra.mxu0 %v1020
        %1052 = vmatprep.subr.bf16.mxu0 0
        %1053 = vmatpush2.bf16.msra.mxu0 0
        %1054 = vmatprep.subr.bf16.mxu0 0
        %1055 = vmatpush2.bf16.msra.mxu0 0
        %1056 = vmatprep.subr.bf16.mxu0 0
        %1057 = vmatpush2.bf16.msra.mxu0 0
        %1058 = vmatprep.subr.bf16.mxu0 0
        %1059 = vmatpush2.bf16.msra.mxu0 0
        %1060 = vmatprep.subr.bf16.mxu0 0
        %1061 = vmatpush2.bf16.msra.mxu0 0
        %1062 = vmatprep.subr.bf16.mxu0 0
        %1063 = vmatpush2.bf16.msra.mxu0 0
        %1064 = vmatprep.subr.bf16.mxu0 0
        %1065 = vmatpush2.bf16.msra.mxu0 0
        %1066 = vmatprep.subr.bf16.mxu0 0
        %1067 = vmatpush2.bf16.msra.mxu0 0
        %1068 = vmatprep.mubr.bf16.mxu0 0
        %1069 = vmatmul.mubr.bf16.gmra.mxu0 %v950
        %v1070 = vpop.f32.mrf.mxu0
        %v1071 = vadd.f32 %v987, %v1070
        %v1072 = vpop.f32.mrf.mxu0
        %v1073 = vpop.f32.mrf.mxu0
        %v1074 = vadd.f32 %v987, %v1073
        %v1075 = vpop.f32.mrf.mxu0
        %1076 = vmatprep.mubr.bf16.mxu0 0
        %1077 = vmatmul.mubr.bf16.gmra.mxu0 %v951
        %v1078 = vpop.f32.mrf.mxu0
        %v1079 = vadd.f32 %v987, %v1078
        %v1080 = vpop.f32.mrf.mxu0
        %v1081 = vpop.f32.mrf.mxu0
        %v1082 = vadd.f32 %v987, %v1081
        %v1083 = vpop.f32.mrf.mxu0
        %1084 = vmatprep.mubr.bf16.mxu0 0
        %1085 = vmatmul.mubr.bf16.gmra.mxu0 %v952
        %v1086 = vpop.f32.mrf.mxu0
        %v1087 = vadd.f32 %v987, %v1086
        %v1088 = vpop.f32.mrf.mxu0
        %v1089 = vpop.f32.mrf.mxu0
        %v1090 = vadd.f32 %v987, %v1089
        %v1091 = vpop.f32.mrf.mxu0
        %1092 = vmatprep.mubr.bf16.mxu0 0
        %1093 = vmatmul.mubr.bf16.gmra.mxu0 %v953
        %v1094 = vpop.f32.mrf.mxu0
        %v1095 = vadd.f32 %v987, %v1094
        %v1096 = vpop.f32.mrf.mxu0
        %v1097 = vpop.f32.mrf.mxu0
        %v1098 = vadd.f32 %v987, %v1097
        %v1099 = vpop.f32.mrf.mxu0
        %1100 = vmatprep.mubr.bf16.mxu0 0
        %1101 = vmatmul.mubr.bf16.gmra.mxu0 %v954
        %v1102 = vpop.f32.mrf.mxu0
        %v1103 = vadd.f32 %v987, %v1102
        %v1104 = vpop.f32.mrf.mxu0
        %v1105 = vpop.f32.mrf.mxu0
        %v1106 = vadd.f32 %v987, %v1105
        %v1107 = vpop.f32.mrf.mxu0
        %1108 = vmatprep.mubr.bf16.mxu0 0
        %1109 = vmatmul.mubr.bf16.gmra.mxu0 %v955
        %v1110 = vpop.f32.mrf.mxu0
        %v1111 = vadd.f32 %v987, %v1110
        %v1112 = vpop.f32.mrf.mxu0
        %v1113 = vpop.f32.mrf.mxu0
        %v1114 = vadd.f32 %v987, %v1113
        %v1115 = vpop.f32.mrf.mxu0
        %1116 = vmatprep.mubr.bf16.mxu0 0
        %1117 = vmatmul.mubr.bf16.gmra.mxu0 %v956
        %v1118 = vpop.f32.mrf.mxu0
        %v1119 = vadd.f32 %v987, %v1118
        %v1120 = vpop.f32.mrf.mxu0
        %v1121 = vpop.f32.mrf.mxu0
        %v1122 = vadd.f32 %v987, %v1121
        %v1123 = vpop.f32.mrf.mxu0
        %1124 = vmatprep.mubr.bf16.mxu0 0
        %1125 = vmatmul.mubr.bf16.gmra.mxu0 %v957
        %v1126 = vpop.f32.mrf.mxu0
        %v1127 = vadd.f32 %v987, %v1126
        %v1128 = vpop.f32.mrf.mxu0
        %v1129 = vpop.f32.mrf.mxu0
        %v1130 = vadd.f32 %v987, %v1129
        %v1131 = vpop.f32.mrf.mxu0
        %1132 = vmatprep.mubr.bf16.mxu0 0
        %1133 = vmatmul.mubr.bf16.gmra.mxu0 %v958
        %v1134 = vpop.f32.mrf.mxu0
        %v1135 = vadd.f32 %v987, %v1134
        %v1136 = vpop.f32.mrf.mxu0
        %v1137 = vpop.f32.mrf.mxu0
        %v1138 = vadd.f32 %v987, %v1137
        %v1139 = vpop.f32.mrf.mxu0
        %1140 = vmatprep.mubr.bf16.mxu0 0
        %1141 = vmatmul.mubr.bf16.gmra.mxu0 %v959
        %v1142 = vpop.f32.mrf.mxu0
        %v1143 = vadd.f32 %v987, %v1142
        %v1144 = vpop.f32.mrf.mxu0
        %v1145 = vpop.f32.mrf.mxu0
        %v1146 = vadd.f32 %v987, %v1145
        %v1147 = vpop.f32.mrf.mxu0
        %1148 = vmatprep.mubr.bf16.mxu0 0
        %1149 = vmatmul.mubr.bf16.gmra.mxu0 %v960
        %v1150 = vpop.f32.mrf.mxu0
        %v1151 = vadd.f32 %v987, %v1150
        %v1152 = vpop.f32.mrf.mxu0
        %v1153 = vpop.f32.mrf.mxu0
        %v1154 = vadd.f32 %v987, %v1153
        %v1155 = vpop.f32.mrf.mxu0
        %1156 = vmatprep.mubr.bf16.mxu0 0
        %1157 = vmatmul.mubr.bf16.gmra.mxu0 %v961
        %v1158 = vpop.f32.mrf.mxu0
        %v1159 = vadd.f32 %v987, %v1158
        %v1160 = vpop.f32.mrf.mxu0
        %v1161 = vpop.f32.mrf.mxu0
        %v1162 = vadd.f32 %v987, %v1161
        %v1163 = vpop.f32.mrf.mxu0
        %1164 = vmatprep.mubr.bf16.mxu0 0
        %1165 = vmatmul.mubr.bf16.gmra.mxu0 %v962
        %v1166 = vpop.f32.mrf.mxu0
        %v1167 = vadd.f32 %v987, %v1166
        %v1168 = vpop.f32.mrf.mxu0
        %v1169 = vpop.f32.mrf.mxu0
        %v1170 = vadd.f32 %v987, %v1169
        %v1171 = vpop.f32.mrf.mxu0
        %1172 = vmatprep.mubr.bf16.mxu0 0
        %1173 = vmatmul.mubr.bf16.gmra.mxu0 %v963
        %v1174 = vpop.f32.mrf.mxu0
        %v1175 = vadd.f32 %v987, %v1174
        %v1176 = vpop.f32.mrf.mxu0
        %v1177 = vpop.f32.mrf.mxu0
        %v1178 = vadd.f32 %v987, %v1177
        %v1179 = vpop.f32.mrf.mxu0
        %1180 = vmatprep.mubr.bf16.mxu0 0
        %1181 = vmatmul.mubr.bf16.gmra.mxu0 %v964
        %v1182 = vpop.f32.mrf.mxu0
        %v1183 = vadd.f32 %v987, %v1182
        %v1184 = vpop.f32.mrf.mxu0
        %v1185 = vpop.f32.mrf.mxu0
        %v1186 = vadd.f32 %v987, %v1185
        %v1187 = vpop.f32.mrf.mxu0
        %1188 = vmatprep.mubr.bf16.mxu0 0
        %1189 = vmatmul.mubr.bf16.gmra.mxu0 %v965
        %v1190 = vpop.f32.mrf.mxu0
        %v1191 = vadd.f32 %v987, %v1190
        %v1192 = vpop.f32.mrf.mxu0
        %v1193 = vpop.f32.mrf.mxu0
        %v1194 = vadd.f32 %v987, %v1193
        %v1195 = vpop.f32.mrf.mxu0
        %1196 = vdwg.mxu0
        %v1197 = vpack.c.bf16 %v1074, %v1071
        %v1198 = vpack.c.bf16 %v1082, %v1079
        %v1199 = vpack.c.bf16 %v1090, %v1087
        %v1200 = vpack.c.bf16 %v1098, %v1095
        %v1201 = vpack.c.bf16 %v1106, %v1103
        %v1202 = vpack.c.bf16 %v1114, %v1111
        %v1203 = vpack.c.bf16 %v1122, %v1119
        %v1204 = vpack.c.bf16 %v1130, %v1127
        %v1205 = vpack.c.bf16 %v1138, %v1135
        %v1206 = vpack.c.bf16 %v1146, %v1143
        %v1207 = vpack.c.bf16 %v1154, %v1151
        %v1208 = vpack.c.bf16 %v1162, %v1159
        %v1209 = vpack.c.bf16 %v1170, %v1167
        %v1210 = vpack.c.bf16 %v1178, %v1175
        %v1211 = vpack.c.bf16 %v1186, %v1183
        %v1212 = vpack.c.bf16 %v1194, %v1191
        %v1229 = vunpack.c.l.b16 %v1197
        %v1230 = vunpack.c.h.b16 %v1197
        %v1231 = vunpack.c.l.b16 %v1198
        %v1232 = vunpack.c.h.b16 %v1198
        %v1233 = vunpack.c.l.b16 %v1199
        %v1234 = vunpack.c.h.b16 %v1199
        %v1235 = vunpack.c.l.b16 %v1200
        %v1236 = vunpack.c.h.b16 %v1200
        %v1237 = vunpack.c.l.b16 %v1201
        %v1238 = vunpack.c.h.b16 %v1201
        %v1239 = vunpack.c.l.b16 %v1202
        %v1240 = vunpack.c.h.b16 %v1202
        %v1241 = vunpack.c.l.b16 %v1203
        %v1242 = vunpack.c.h.b16 %v1203
        %v1243 = vunpack.c.l.b16 %v1204
        %v1244 = vunpack.c.h.b16 %v1204
        %v1245 = vunpack.c.l.b16 %v1205
        %v1246 = vunpack.c.h.b16 %v1205
        %v1247 = vunpack.c.l.b16 %v1206
        %v1248 = vunpack.c.h.b16 %v1206
        %v1249 = vunpack.c.l.b16 %v1207
        %v1250 = vunpack.c.h.b16 %v1207
        %v1251 = vunpack.c.l.b16 %v1208
        %v1252 = vunpack.c.h.b16 %v1208
        %v1253 = vunpack.c.l.b16 %v1209
        %v1254 = vunpack.c.h.b16 %v1209
        %v1255 = vunpack.c.l.b16 %v1210
        %v1256 = vunpack.c.h.b16 %v1210
        %v1257 = vunpack.c.l.b16 %v1211
        %v1258 = vunpack.c.h.b16 %v1211
        %v1259 = vunpack.c.l.b16 %v1212
        %v1260 = vunpack.c.h.b16 %v1212
        %v1261 = vpack.c.b16 %v1229, %v1229
        %v1262 = vpack.c.b16 %v1230, %v1230
        %v1263 = vpack.c.b16 %v1231, %v1231
        %v1264 = vpack.c.b16 %v1232, %v1232
        %v1265 = vpack.c.b16 %v1233, %v1233
        %v1266 = vpack.c.b16 %v1234, %v1234
        %v1267 = vpack.c.b16 %v1235, %v1235
        %v1268 = vpack.c.b16 %v1236, %v1236
        %v1269 = vpack.c.b16 %v1237, %v1237
        %v1270 = vpack.c.b16 %v1238, %v1238
        %v1271 = vpack.c.b16 %v1239, %v1239
        %v1272 = vpack.c.b16 %v1240, %v1240
        %v1273 = vpack.c.b16 %v1241, %v1241
        %v1274 = vpack.c.b16 %v1242, %v1242
        %v1275 = vpack.c.b16 %v1243, %v1243
        %v1276 = vpack.c.b16 %v1244, %v1244
        %v1277 = vpack.c.b16 %v1245, %v1245
        %v1278 = vpack.c.b16 %v1246, %v1246
        %v1279 = vpack.c.b16 %v1247, %v1247
        %v1280 = vpack.c.b16 %v1248, %v1248
        %v1281 = vpack.c.b16 %v1249, %v1249
        %v1282 = vpack.c.b16 %v1250, %v1250
        %v1283 = vpack.c.b16 %v1251, %v1251
        %v1284 = vpack.c.b16 %v1252, %v1252
        %v1285 = vpack.c.b16 %v1253, %v1253
        %v1286 = vpack.c.b16 %v1254, %v1254
        %v1287 = vpack.c.b16 %v1255, %v1255
        %v1288 = vpack.c.b16 %v1256, %v1256
        %v1289 = vpack.c.b16 %v1257, %v1257
        %v1290 = vpack.c.b16 %v1258, %v1258
        %v1291 = vpack.c.b16 %v1259, %v1259
        %v1292 = vpack.c.b16 %v1260, %v1260
        %1325 = vst [vmem:[%s340] sm:$0xf] %v1261
        %1326 = vst [vmem:[%s340 + $0x4] sm:$0xf] %v1262
        %1327 = vst [vmem:[%s340 + $0x8] sm:$0xf] %v1263
        %1328 = vst [vmem:[%s340 + $0xc] sm:$0xf] %v1264
        %1329 = vst [vmem:[%s340 + $0x10] sm:$0xf] %v1265
        %1330 = vst [vmem:[%s340 + $0x14] sm:$0xf] %v1266
        %1331 = vst [vmem:[%s340 + $0x18] sm:$0xf] %v1267
        %1332 = vst [vmem:[%s340 + $0x1c] sm:$0xf] %v1268
        %1333 = vst [vmem:[%s340 + $0x20] sm:$0xf] %v1269
        %1334 = vst [vmem:[%s340 + $0x24] sm:$0xf] %v1270
        %1335 = vst [vmem:[%s340 + $0x28] sm:$0xf] %v1271
        %1336 = vst [vmem:[%s340 + $0x2c] sm:$0xf] %v1272
        %1337 = vst [vmem:[%s340 + $0x30] sm:$0xf] %v1273
        %1338 = vst [vmem:[%s340 + $0x34] sm:$0xf] %v1274
        %1339 = vst [vmem:[%s340 + $0x38] sm:$0xf] %v1275
        %1340 = vst [vmem:[%s340 + $0x3c] sm:$0xf] %v1276
        %1341 = vst [vmem:[%s340 + $0x40] sm:$0xf] %v1277
        %1342 = vst [vmem:[%s340 + $0x44] sm:$0xf] %v1278
        %1343 = vst [vmem:[%s340 + $0x48] sm:$0xf] %v1279
        %1344 = vst [vmem:[%s340 + $0x4c] sm:$0xf] %v1280
        %1345 = vst [vmem:[%s340 + $0x50] sm:$0xf] %v1281
        %1346 = vst [vmem:[%s340 + $0x54] sm:$0xf] %v1282
        %1347 = vst [vmem:[%s340 + $0x58] sm:$0xf] %v1283
        %1348 = vst [vmem:[%s340 + $0x5c] sm:$0xf] %v1284
        %1349 = vst [vmem:[%s340 + $0x60] sm:$0xf] %v1285
        %1350 = vst [vmem:[%s340 + $0x64] sm:$0xf] %v1286
        %1351 = vst [vmem:[%s340 + $0x68] sm:$0xf] %v1287
        %1352 = vst [vmem:[%s340 + $0x6c] sm:$0xf] %v1288
        %1353 = vst [vmem:[%s340 + $0x70] sm:$0xf] %v1289
        %1354 = vst [vmem:[%s340 + $0x74] sm:$0xf] %v1290
        %1355 = vst [vmem:[%s340 + $0x78] sm:$0xf] %v1291
        %1356 = vst [vmem:[%s340 + $0x7c] sm:$0xf] %v1292
        %s1357 = sand.u32 %s186, 1
        %s1358 = scalar_lea.sflag [#allocation4], %s1357
        %s1359 = sand.u32 %s186, 1
        %s1360 = smul.addr %s1359, 128
        %s1361 = scalar_lea.vmem [#allocation10], %s1360
        // Predicated region
        $region65: #{tpu_custom_call.1} parent=47 // pred_check
          %p1362 = pneg %p196
        $region66: #{tpu_custom_call.1} parent=47 // pred_check_branch
          %1364 = sbr.rel (%p1362) target = $region68
        $region67: #{tpu_custom_call.1} parent=47 // pred_region
          %s1365 = smul.u32 32, %s26
          %s1367 = ssub.s32 2048, 2048
          %1368 = vsyncadd %s1358, %s1367
          %s1369 = smul.addr %s1365, 64
          %s1370 = scalar_lea.hbm %s7, %s1369
          %s1371 = sshll.u32 %s1361, 4
          %s1372 = int_to_ptr.vmem [resolvable:$true] %s1371
          %1377 = dma.vmem_to_hbm [thread:$0]  %s1372, 2048, %s1370, %s1358, 64, 64, 4
        $region68: #{tpu_custom_call.1} parent=47 // pred_fallthru
          _
      $region48: #{tpu_custom_call.1} parent=5 // pred_fallthru
        _
      %p1378 = scmp.le.s32.totalorder 2, %s21
      // Predicated region
      $region69: #{tpu_custom_call.1} parent=5 // pred_check
        %p1379 = pneg %p1378
      $region70: #{tpu_custom_call.1} parent=5 // pred_check_branch
        %1381 = sbr.rel (%p1379) target = $region72
      $region71: #{tpu_custom_call.1} parent=5 // pred_region
        %s1382 = ssub.s32 %s21, 2
        // Predicated region
        $region73: #{tpu_custom_call.1} parent=71 // pred_check
          %p1383 = pneg %p202
        $region74: #{tpu_custom_call.1} parent=71 // pred_check_branch
          %1385 = sbr.rel (%p1383) target = $region76
        $region75: #{tpu_custom_call.1} parent=71 // pred_region
          %s1386 = sand.u32 %s187, 1
          %s1387 = scalar_lea.sflag [#allocation4], %s1386
          %s1388 = sand.u32 %s187, 1
          %s1389 = smul.addr %s1388, 128
          %s1390 = scalar_lea.vmem [#allocation10], %s1389
          %1391 = dma.done %s1387, 2048
        $region76: #{tpu_custom_call.1} parent=71 // pred_fallthru
          _
      $region72: #{tpu_custom_call.1} parent=5 // pred_fallthru
        _
    $region6: #{tpu_custom_call.1} parent=1 // loop_footer
      %s25 = sadd.s32 1, %s21
    $region7: #{tpu_custom_call.1} parent=1 // loop_footer_branch
      %20 = sbr.rel target = $region3
    $region8: #{tpu_custom_call.1} parent=1 // loop_exit
      _
    %1392 = vsyncpa [#allocation3], 1
    %s1393 = scalar_lea.sflag [#allocation3], 1
    %1394 = vsyncpa %s1393, 1
    %1395 = vsyncpa [#allocation6], 1
    %1396 = vsyncpa [#allocation9], 1
    %1397 = vsyncpa [#allocation4], 1
    %s1398 = scalar_lea.sflag [#allocation4], 1
    %1399 = vsyncpa %s1398, 1

</llo_original>
